<compile_context>
chip_gen: v5e
topology: v5e:2x2
jax: 0.10.0
libtpu: 0.0.40
codegen_flags: <defaults>
</compile_context>

<pallas_src>
import functools

import jax
import jax.numpy as jnp
from jax.experimental import pallas as pl
from jax.experimental.pallas import tpu as pltpu

LN_EPS = 1e-5


def _layernorm_f32(v, gamma, beta):
    mu = jnp.mean(v, axis=-1, keepdims=True)
    var = jnp.mean((v - mu) * (v - mu), axis=-1, keepdims=True)
    return (v - mu) * jax.lax.rsqrt(var + LN_EPS) * gamma + beta


def _perceiver_attn_kernel(
    x_ref,      # (tile, n1, D)   activations (f32 or bf16)
    lat_ref,    # (tile, n2, D)
    ln_ref,     # (4, D): [norm_media_w, norm_media_b, norm_latents_w, norm_latents_b]
    wq_ref,     # (D, inner)      softmax scale folded in
    wk_ref,     # (D, inner)
    wv_ref,     # (D, inner)
    wo_ref,     # (inner, D)
    out_ref,    # (tile, n2, D)
    q_scr,      # (tile, n2, inner)        VMEM scratch
    k_scr,      # (tile, n1 + n2, inner)   VMEM scratch (joint [x ; latents] keys)
    v_scr,      # (tile, n1 + n2, inner)   VMEM scratch
    o_scr,      # (tile, n2, inner)        VMEM scratch (per-head outputs, h-outer)
    *,
    heads,
    dim_head,
    compute_dtype,
    approx_recip,
):
    bt, n1, D = x_ref.shape
    n2 = lat_ref.shape[1]
    inner = heads * dim_head

    ln = ln_ref[...].astype(jnp.float32)

    # LayerNorm in f32 on flattened (rows, D) slabs; MXU operands are
    # compute_dtype (f32 accumulation enforced via preferred_element_type).
    x2 = x_ref[...].astype(jnp.float32).reshape(bt * n1, D)
    l2 = lat_ref[...].astype(jnp.float32).reshape(bt * n2, D)
    xn = _layernorm_f32(x2, ln[0:1], ln[1:2]).astype(compute_dtype)
    latn = _layernorm_f32(l2, ln[2:3], ln[3:4]).astype(compute_dtype)

    # ---- Fused, full-width projections (N = heads*dim_head, K = D). ------
    # Each result goes straight into VMEM scratch so nothing large stays live
    # in vregs across the per-head attention loop below.
    q = jnp.dot(latn, wq_ref[...], preferred_element_type=jnp.float32)
    q_scr[...] = q.astype(compute_dtype).reshape(bt, n2, inner)

    # k/v over [x ; latents]: two row blocks of the same projection written
    # into one (bt, n1+n2, inner) slab -> joint softmax with a single
    # contiguous key/value block (no in-kernel concat).
    kx = jnp.dot(xn, wk_ref[...], preferred_element_type=jnp.float32)
    k_scr[:, :n1, :] = kx.astype(compute_dtype).reshape(bt, n1, inner)
    kl = jnp.dot(latn, wk_ref[...], preferred_element_type=jnp.float32)
    k_scr[:, n1:, :] = kl.astype(compute_dtype).reshape(bt, n2, inner)

    vx = jnp.dot(xn, wv_ref[...], preferred_element_type=jnp.float32)
    v_scr[:, :n1, :] = vx.astype(compute_dtype).reshape(bt, n1, inner)
    vl = jnp.dot(latn, wv_ref[...], preferred_element_type=jnp.float32)
    v_scr[:, n1:, :] = vl.astype(compute_dtype).reshape(bt, n2, inner)

    # ---- Per-head attention, batched over the bt tile. -------------------
    # heads is small & static -> unrolled; each iteration's temporaries are
    # consumed by the o_scr store, so no value is carried across iterations.
    for h in range(heads):
        lo, hi = h * dim_head, (h + 1) * dim_head
        q_h = q_scr[:, :, lo:hi]          # (bt, n2, dh)
        k_h = k_scr[:, :, lo:hi]          # (bt, n1+n2, dh)
        v_h = v_scr[:, :, lo:hi]          # (bt, n1+n2, dh)

        sim = jnp.einsum("bqd,bkd->bqk", q_h, k_h,
                         preferred_element_type=jnp.float32)
        m = jnp.max(sim, axis=-1, keepdims=True)
        p = jnp.exp(sim - m)
        inv_d = pl.reciprocal(jnp.sum(p, axis=-1, keepdims=True),
                              approx=approx_recip)            # EUP slot
        attn = (p * inv_d).astype(compute_dtype)
        o_h = jnp.einsum("bqk,bkd->bqd", attn, v_h,
                         preferred_element_type=jnp.float32)
        o_scr[:, :, lo:hi] = o_h.astype(compute_dtype)

    # ---- Fused output projection (K = heads*dim_head, N = D). ------------
    o_all = o_scr[...].reshape(bt * n2, inner)
    res = jnp.dot(o_all, wo_ref[...], preferred_element_type=jnp.float32)
    out_ref[...] = res.reshape(bt, n2, D).astype(out_ref.dtype)


def _pick_bt_tile(bt_total, requested, *, max_fit):
    """Largest divisor of bt_total <= min(requested, max_fit), preferring an
    even number of grid steps (v7x: 2 TensorCores), then any multi-step grid."""
    cap = max(1, min(int(requested), int(max_fit), bt_total))
    divisors = [d for d in range(1, bt_total + 1) if bt_total % d == 0]
    cands = [d for d in divisors if d <= cap] or [1]
    even = [d for d in cands if (bt_total // d) % 2 == 0]
    if even:
        return max(even)
    multi = [d for d in cands if bt_total // d >= 2]
    return max(multi) if multi else max(cands)


def prepare_params(params, *, heads, dim_head, compute_dtype=jnp.bfloat16):
    """One-time host-side packing of the PyTorch-layout weights.

    Weights are pre-transposed to (D, .) / (inner, D) layout, the kv
    projection is split into k / v, and the softmax scale is folded into wq.
    bf16 compute_dtype is the recommended path on v5e, v6e and v7x.
    """
    inner = heads * dim_head
    scale = dim_head ** (-0.5)

    ln = jnp.stack([
        params["norm_media_w"], params["norm_media_b"],
        params["norm_latents_w"], params["norm_latents_b"],
    ]).astype(jnp.float32)                                   # (4, D)

    wq = (params["to_q_w"].T * scale).astype(compute_dtype)  # (D, inner)
    wkv = params["to_kv_w"].T                                # (D, 2*inner)
    wk = wkv[:, :inner].astype(compute_dtype)                # (D, inner)
    wv = wkv[:, inner:].astype(compute_dtype)                # (D, inner)
    wo = params["to_out_w"].T.astype(compute_dtype)          # (inner, D)

    return {"ln": ln, "wq": wq, "wk": wk, "wv": wv, "wo": wo}


def perceiver_attention(x, latents, prepared, *, heads, dim_head, bt_tile=8,
                        vmem_limit_bytes=48 * 1024 * 1024, out_dtype=None):
    """x: (B, T, n1, D); latents: (B, T, n2, D) -> (B, T, n2, D)."""
    B, T, n1, D = x.shape
    n2 = latents.shape[2]
    inner = heads * dim_head
    bt_total = B * T

    compute_dtype = prepared["wq"].dtype
    # bf16 activations halve HBM<->VMEM DMA bytes and input double-buffers;
    # LayerNorm / softmax still run in f32 inside the kernel.
    act_dtype = jnp.bfloat16 if compute_dtype == jnp.bfloat16 else x.dtype
    if out_dtype is None:
        out_dtype = act_dtype

    cd_b = jnp.dtype(compute_dtype).itemsize
    act_b = jnp.dtype(act_dtype).itemsize
    out_b = jnp.dtype(out_dtype).itemsize

    # VMEM budget (v7x: 64 MiB physical).  Weights are grid-invariant but
    # still double-buffered by the pipeline, so count them twice.
    weight_bytes = 2 * ((3 * D * inner + inner * D) * cd_b + 4 * D * 4)
    per_slice = (
        2 * (n1 + n2) * D * act_b          # double-buffered x / latents tiles
        + 2 * n2 * D * out_b               # double-buffered output tile
        + (2 * n2 + 2 * (n1 + n2)) * inner * cd_b   # q/k/v/o scratch slabs
        + (n1 + n2) * D * 4                # f32 layernormed activations
        + (n1 + n2) * max(inner, D) * 4    # f32 matmul / sim temporaries
    )
    budget = max(vmem_limit_bytes - weight_bytes, per_slice)
    tile = _pick_bt_tile(bt_total, bt_tile, max_fit=budget // per_slice)
    grid = (bt_total // tile,)

    x_f = x.reshape(bt_total, n1, D).astype(act_dtype)
    lat_f = latents.reshape(bt_total, n2, D).astype(act_dtype)

    kernel = functools.partial(
        _perceiver_attn_kernel,
        heads=heads, dim_head=dim_head, compute_dtype=compute_dtype,
        # exact reciprocal on the f32 path keeps the tight correctness check;
        # the bf16 production path uses the (free) EUP approximation.
        approx_recip=(compute_dtype == jnp.bfloat16))

    const = lambda shape: pl.BlockSpec(shape, lambda i: tuple(0 for _ in shape))
    # NOTE: on v7x one could add pipeline_mode=pl.Buffered(1) to the constant
    # weight specs to drop their second VMEM buffer; left at the default for
    # broad compatibility.

    out = pl.pallas_call(
        kernel,
        out_shape=jax.ShapeDtypeStruct((bt_total, n2, D), out_dtype),
        grid_spec=pltpu.PrefetchScalarGridSpec(
            num_scalar_prefetch=0,
            grid=grid,
            in_specs=[
                pl.BlockSpec((tile, n1, D), lambda i: (i, 0, 0)),
                pl.BlockSpec((tile, n2, D), lambda i: (i, 0, 0)),
                const((4, D)),
                const((D, inner)),
                const((D, inner)),
                const((D, inner)),
                const((inner, D)),
            ],
            out_specs=pl.BlockSpec((tile, n2, D), lambda i: (i, 0, 0)),
            scratch_shapes=[
                pltpu.VMEM((tile, n2, inner), compute_dtype),        # q
                pltpu.VMEM((tile, n1 + n2, inner), compute_dtype),   # k (joint)
                pltpu.VMEM((tile, n1 + n2, inner), compute_dtype),   # v (joint)
                pltpu.VMEM((tile, n2, inner), compute_dtype),        # per-head out
            ],
        ),
        compiler_params=pltpu.CompilerParams(
            dimension_semantics=("parallel",),
            vmem_limit_bytes=int(vmem_limit_bytes),
        ),
    )(x_f, lat_f, prepared["ln"], prepared["wq"], prepared["wk"],
      prepared["wv"], prepared["wo"])

    return out.reshape(B, T, n2, D)


def perceiver_attention_ref(x, latents, params, *, heads, dim_head):
    """Pure-JAX reference mirroring the PyTorch forward."""
    inner = heads * dim_head
    scale = dim_head ** (-0.5)

    def ln(v, g, b):
        mu = jnp.mean(v, axis=-1, keepdims=True)
        var = jnp.mean((v - mu) ** 2, axis=-1, keepdims=True)
        return (v - mu) * jax.lax.rsqrt(var + LN_EPS) * g + b

    xn = ln(x, params["norm_media_w"], params["norm_media_b"])
    latn = ln(latents, params["norm_latents_w"], params["norm_latents_b"])
    q = latn @ params["to_q_w"].T
    kv_in = jnp.concatenate([xn, latn], axis=-2)
    kv = kv_in @ params["to_kv_w"].T
    k, v = kv[..., :inner], kv[..., inner:]

    def split_heads(t):  # b t n (h d) -> b h t n d
        b, T, n, _ = t.shape
        return t.reshape(b, T, n, heads, dim_head).transpose(0, 3, 1, 2, 4)

    q, k, v = split_heads(q) * scale, split_heads(k), split_heads(v)
    sim = jnp.einsum("...id,...jd->...ij", q, k)
    sim = sim - jnp.max(sim, axis=-1, keepdims=True)
    attn = jax.nn.softmax(sim, axis=-1)
    out = jnp.einsum("...ij,...jd->...id", attn, v)
    b, h, T, n, d = out.shape
    out = out.transpose(0, 2, 3, 1, 4).reshape(b, T, n, h * d)
    return out @ params["to_out_w"].T


def init_params(key, dim, heads, dim_head):
    inner = heads * dim_head
    ks = jax.random.split(key, 3)

    def linear_w(k, out_f, in_f):
        bound = 1.0 / (in_f ** 0.5)
        return jax.random.uniform(k, (out_f, in_f), jnp.float32, -bound, bound)

    return {
        "norm_media_w": jnp.ones((dim,), jnp.float32),
        "norm_media_b": jnp.zeros((dim,), jnp.float32),
        "norm_latents_w": jnp.ones((dim,), jnp.float32),
        "norm_latents_b": jnp.zeros((dim,), jnp.float32),
        "to_q_w": linear_w(ks[0], inner, dim),
        "to_kv_w": linear_w(ks[1], 2 * inner, dim),
        "to_out_w": linear_w(ks[2], dim, inner),
    }


if __name__ == "__main__":
    B, T, n1, n2, D = 2, 2, 16, 8, 32
    heads, dim_head = 4, 16

    key = jax.random.PRNGKey(0)
    k_x, k_lat, k_p = jax.random.split(key, 3)
    x = jax.random.normal(k_x, (B, T, n1, D), jnp.float32)
    latents = jax.random.normal(k_lat, (B, T, n2, D), jnp.float32)
    params = init_params(k_p, D, heads, dim_head)

    ref = perceiver_attention_ref(x, latents, params, heads=heads, dim_head=dim_head)

    # f32 MXU operands / f32 activations: tight correctness check.
    prep_f32 = prepare_params(params, heads=heads, dim_head=dim_head,
                              compute_dtype=jnp.float32)
    out = jax.block_until_ready(
        perceiver_attention(x, latents, prep_f32, heads=heads,
                            dim_head=dim_head, bt_tile=8))
    assert out.shape == (B, T, n2, D)
    assert jnp.allclose(out, ref, atol=1e-4, rtol=1e-4), "f32 mismatch vs reference"

    # bf16 MXU operands + bf16 activation DMA (recommended on v5e/v6e/v7x),
    # f32 LayerNorm/softmax/accumulation; loose tolerance.
    prep_bf16 = prepare_params(params, heads=heads, dim_head=dim_head,
                               compute_dtype=jnp.bfloat16)
    out_bf16 = jax.block_until_ready(
        perceiver_attention(x, latents, prep_bf16, heads=heads,
                            dim_head=dim_head, bt_tile=8))
    assert out_bf16.dtype == jnp.bfloat16
    assert jnp.allclose(out_bf16.astype(jnp.float32), ref,
                        atol=5e-2, rtol=5e-2), "bf16 mismatch vs reference"

    print("KERNEL_OK")
</pallas_src>

<mosaic_0001>
module attributes {stable_mosaic.version = 11 : i64} {
  func.func @_perceiver_attn_kernel(%arg0: i32, %arg1: memref<2x16x32xf32, #tpu.memory_space<vmem>>, %arg2: memref<2x8x32xf32, #tpu.memory_space<vmem>>, %arg3: memref<4x32xf32, #tpu.memory_space<vmem>>, %arg4: memref<32x64xf32, #tpu.memory_space<vmem>>, %arg5: memref<32x64xf32, #tpu.memory_space<vmem>>, %arg6: memref<32x64xf32, #tpu.memory_space<vmem>>, %arg7: memref<64x32xf32, #tpu.memory_space<vmem>>, %arg8: memref<2x8x32xf32, #tpu.memory_space<vmem>>, %arg9: memref<2x8x64xf32, #tpu.memory_space<vmem>>, %arg10: memref<2x24x64xf32, #tpu.memory_space<vmem>>, %arg11: memref<2x24x64xf32, #tpu.memory_space<vmem>>, %arg12: memref<2x8x64xf32, #tpu.memory_space<vmem>>) attributes {dimension_semantics = [#tpu.dimension_semantics<parallel>], iteration_bounds = array<i64: 2>, scalar_prefetch = 0 : i64, scratch_operands = 4 : i64, tpu.core_type = #tpu.core_type<tc>, window_params = [{transform_indices = @transform_0, window_bounds = array<i64: 2, 16, 32>}, {transform_indices = @transform_1, window_bounds = array<i64: 2, 8, 32>}, {pipeline_mode = #tpu.pipeline_mode<synchronous>, transform_indices = @transform_2, window_bounds = array<i64: 4, 32>}, {pipeline_mode = #tpu.pipeline_mode<synchronous>, transform_indices = @transform_3, window_bounds = array<i64: 32, 64>}, {pipeline_mode = #tpu.pipeline_mode<synchronous>, transform_indices = @transform_4, window_bounds = array<i64: 32, 64>}, {pipeline_mode = #tpu.pipeline_mode<synchronous>, transform_indices = @transform_5, window_bounds = array<i64: 32, 64>}, {pipeline_mode = #tpu.pipeline_mode<synchronous>, transform_indices = @transform_6, window_bounds = array<i64: 64, 32>}, {transform_indices = @transform_7, window_bounds = array<i64: 2, 8, 32>}]} {
    %c0 = arith.constant 0 : index
    %c0_0 = arith.constant 0 : index
    %0 = vector.load %arg3[%c0, %c0_0] : memref<4x32xf32, #tpu.memory_space<vmem>>, vector<4x32xf32>
    %c0_1 = arith.constant 0 : index
    %c0_2 = arith.constant 0 : index
    %c0_3 = arith.constant 0 : index
    %1 = vector.load %arg1[%c0_1, %c0_2, %c0_3] : memref<2x16x32xf32, #tpu.memory_space<vmem>>, vector<2x16x32xf32>
    %2 = vector.shape_cast %1 : vector<2x16x32xf32> to vector<32x32xf32>
    %c0_4 = arith.constant 0 : index
    %c0_5 = arith.constant 0 : index
    %c0_6 = arith.constant 0 : index
    %3 = vector.load %arg2[%c0_4, %c0_5, %c0_6] : memref<2x8x32xf32, #tpu.memory_space<vmem>>, vector<2x8x32xf32>
    %4 = vector.shape_cast %3 : vector<2x8x32xf32> to vector<16x32xf32>
    %5 = vector.extract_strided_slice %0 {offsets = [0, 0], sizes = [1, 32], strides = [1, 1]} : vector<4x32xf32> to vector<1x32xf32>
    %6 = vector.extract_strided_slice %0 {offsets = [1, 0], sizes = [1, 32], strides = [1, 1]} : vector<4x32xf32> to vector<1x32xf32>
    %cst = arith.constant dense<0.000000e+00> : vector<32xf32>
    %7 = vector.multi_reduction <add>, %2, %cst [1] : vector<32x32xf32> to vector<32xf32>
    %8 = vector.shape_cast %7 : vector<32xf32> to vector<32x1xf32>
    %cst_7 = arith.constant 3.200000e+01 : f32
    %9 = vector.broadcast %cst_7 : f32 to vector<32x1xf32>
    %10 = arith.divf %8, %9 : vector<32x1xf32>
    %11 = vector.broadcast %10 : vector<32x1xf32> to vector<32x32xf32>
    %12 = arith.subf %2, %11 : vector<32x32xf32>
    %13 = vector.broadcast %10 : vector<32x1xf32> to vector<32x32xf32>
    %14 = arith.subf %2, %13 : vector<32x32xf32>
    %15 = arith.mulf %12, %14 : vector<32x32xf32>
    %cst_8 = arith.constant dense<0.000000e+00> : vector<32xf32>
    %16 = vector.multi_reduction <add>, %15, %cst_8 [1] : vector<32x32xf32> to vector<32xf32>
    %17 = vector.shape_cast %16 : vector<32xf32> to vector<32x1xf32>
    %cst_9 = arith.constant 3.200000e+01 : f32
    %18 = vector.broadcast %cst_9 : f32 to vector<32x1xf32>
    %19 = arith.divf %17, %18 : vector<32x1xf32>
    %20 = vector.broadcast %10 : vector<32x1xf32> to vector<32x32xf32>
    %21 = arith.subf %2, %20 : vector<32x32xf32>
    %cst_10 = arith.constant 9.99999974E-6 : f32
    %22 = vector.broadcast %cst_10 : f32 to vector<32x1xf32>
    %23 = arith.addf %19, %22 : vector<32x1xf32>
    %24 = math.rsqrt %23 : vector<32x1xf32>
    %25 = vector.broadcast %24 : vector<32x1xf32> to vector<32x32xf32>
    %26 = arith.mulf %21, %25 : vector<32x32xf32>
    %27 = vector.broadcast %5 : vector<1x32xf32> to vector<32x32xf32>
    %28 = arith.mulf %26, %27 : vector<32x32xf32>
    %29 = vector.broadcast %6 : vector<1x32xf32> to vector<32x32xf32>
    %30 = arith.addf %28, %29 : vector<32x32xf32>
    %31 = vector.extract_strided_slice %0 {offsets = [2, 0], sizes = [1, 32], strides = [1, 1]} : vector<4x32xf32> to vector<1x32xf32>
    %32 = vector.extract_strided_slice %0 {offsets = [3, 0], sizes = [1, 32], strides = [1, 1]} : vector<4x32xf32> to vector<1x32xf32>
    %cst_11 = arith.constant dense<0.000000e+00> : vector<16xf32>
    %33 = vector.multi_reduction <add>, %4, %cst_11 [1] : vector<16x32xf32> to vector<16xf32>
    %34 = vector.shape_cast %33 : vector<16xf32> to vector<16x1xf32>
    %cst_12 = arith.constant 3.200000e+01 : f32
    %35 = vector.broadcast %cst_12 : f32 to vector<16x1xf32>
    %36 = arith.divf %34, %35 : vector<16x1xf32>
    %37 = vector.broadcast %36 : vector<16x1xf32> to vector<16x32xf32>
    %38 = arith.subf %4, %37 : vector<16x32xf32>
    %39 = vector.broadcast %36 : vector<16x1xf32> to vector<16x32xf32>
    %40 = arith.subf %4, %39 : vector<16x32xf32>
    %41 = arith.mulf %38, %40 : vector<16x32xf32>
    %cst_13 = arith.constant dense<0.000000e+00> : vector<16xf32>
    %42 = vector.multi_reduction <add>, %41, %cst_13 [1] : vector<16x32xf32> to vector<16xf32>
    %43 = vector.shape_cast %42 : vector<16xf32> to vector<16x1xf32>
    %cst_14 = arith.constant 3.200000e+01 : f32
    %44 = vector.broadcast %cst_14 : f32 to vector<16x1xf32>
    %45 = arith.divf %43, %44 : vector<16x1xf32>
    %46 = vector.broadcast %36 : vector<16x1xf32> to vector<16x32xf32>
    %47 = arith.subf %4, %46 : vector<16x32xf32>
    %cst_15 = arith.constant 9.99999974E-6 : f32
    %48 = vector.broadcast %cst_15 : f32 to vector<16x1xf32>
    %49 = arith.addf %45, %48 : vector<16x1xf32>
    %50 = math.rsqrt %49 : vector<16x1xf32>
    %51 = vector.broadcast %50 : vector<16x1xf32> to vector<16x32xf32>
    %52 = arith.mulf %47, %51 : vector<16x32xf32>
    %53 = vector.broadcast %31 : vector<1x32xf32> to vector<16x32xf32>
    %54 = arith.mulf %52, %53 : vector<16x32xf32>
    %55 = vector.broadcast %32 : vector<1x32xf32> to vector<16x32xf32>
    %56 = arith.addf %54, %55 : vector<16x32xf32>
    %c0_16 = arith.constant 0 : index
    %c0_17 = arith.constant 0 : index
    %57 = vector.load %arg4[%c0_16, %c0_17] : memref<32x64xf32, #tpu.memory_space<vmem>>, vector<32x64xf32>
    %cst_18 = arith.constant dense<0.000000e+00> : vector<16x64xf32>
    %58 = tpu.matmul %56, %57, %cst_18 {dimension_numbers = #tpu.dot_dimension_numbers<[1], [0], [0], [1], [0, 0, 1, 1], [], []>} : vector<16x32xf32>, vector<32x64xf32>, vector<16x64xf32> -> vector<16x64xf32>
    %59 = vector.shape_cast %58 : vector<16x64xf32> to vector<2x8x64xf32>
    %c0_19 = arith.constant 0 : index
    %c0_20 = arith.constant 0 : index
    %c0_21 = arith.constant 0 : index
    %60 = vector.load %arg9[%c0_19, %c0_20, %c0_21] : memref<2x8x64xf32, #tpu.memory_space<vmem>>, vector<2x8x64xf32>
    tpu.vector_store %arg9[%c0_19, %c0_20, %c0_21], %59 {strides = array<i32>} : memref<2x8x64xf32, #tpu.memory_space<vmem>>, vector<2x8x64xf32>,
    %c0_22 = arith.constant 0 : index
    %c0_23 = arith.constant 0 : index
    %61 = vector.load %arg5[%c0_22, %c0_23] : memref<32x64xf32, #tpu.memory_space<vmem>>, vector<32x64xf32>
    %cst_24 = arith.constant dense<0.000000e+00> : vector<32x64xf32>
    %62 = tpu.matmul %30, %61, %cst_24 {dimension_numbers = #tpu.dot_dimension_numbers<[1], [0], [0], [1], [0, 0, 1, 1], [], []>} : vector<32x32xf32>, vector<32x64xf32>, vector<32x64xf32> -> vector<32x64xf32>
    %63 = vector.shape_cast %62 : vector<32x64xf32> to vector<2x16x64xf32>
    %c0_25 = arith.constant 0 : index
    %c0_26 = arith.constant 0 : index
    %c0_27 = arith.constant 0 : index
    %64 = vector.load %arg10[%c0_25, %c0_26, %c0_27] : memref<2x24x64xf32, #tpu.memory_space<vmem>>, vector<2x16x64xf32>
    tpu.vector_store %arg10[%c0_25, %c0_26, %c0_27], %63 {strides = array<i32>} : memref<2x24x64xf32, #tpu.memory_space<vmem>>, vector<2x16x64xf32>,
    %c0_28 = arith.constant 0 : index
    %c0_29 = arith.constant 0 : index
    %65 = vector.load %arg5[%c0_28, %c0_29] : memref<32x64xf32, #tpu.memory_space<vmem>>, vector<32x64xf32>
    %cst_30 = arith.constant dense<0.000000e+00> : vector<16x64xf32>
    %66 = tpu.matmul %56, %65, %cst_30 {dimension_numbers = #tpu.dot_dimension_numbers<[1], [0], [0], [1], [0, 0, 1, 1], [], []>} : vector<16x32xf32>, vector<32x64xf32>, vector<16x64xf32> -> vector<16x64xf32>
    %67 = vector.shape_cast %66 : vector<16x64xf32> to vector<2x8x64xf32>
    %c0_31 = arith.constant 0 : index
    %c16 = arith.constant 16 : index
    %c0_32 = arith.constant 0 : index
    %68 = vector.load %arg10[%c0_31, %c16, %c0_32] : memref<2x24x64xf32, #tpu.memory_space<vmem>>, vector<2x8x64xf32>
    tpu.vector_store %arg10[%c0_31, %c16, %c0_32], %67 {strides = array<i32>} : memref<2x24x64xf32, #tpu.memory_space<vmem>>, vector<2x8x64xf32>,
    %c0_33 = arith.constant 0 : index
    %c0_34 = arith.constant 0 : index
    %69 = vector.load %arg6[%c0_33, %c0_34] : memref<32x64xf32, #tpu.memory_space<vmem>>, vector<32x64xf32>
    %cst_35 = arith.constant dense<0.000000e+00> : vector<32x64xf32>
    %70 = tpu.matmul %30, %69, %cst_35 {dimension_numbers = #tpu.dot_dimension_numbers<[1], [0], [0], [1], [0, 0, 1, 1], [], []>} : vector<32x32xf32>, vector<32x64xf32>, vector<32x64xf32> -> vector<32x64xf32>
    %71 = vector.shape_cast %70 : vector<32x64xf32> to vector<2x16x64xf32>
    %c0_36 = arith.constant 0 : index
    %c0_37 = arith.constant 0 : index
    %c0_38 = arith.constant 0 : index
    %72 = vector.load %arg11[%c0_36, %c0_37, %c0_38] : memref<2x24x64xf32, #tpu.memory_space<vmem>>, vector<2x16x64xf32>
    tpu.vector_store %arg11[%c0_36, %c0_37, %c0_38], %71 {strides = array<i32>} : memref<2x24x64xf32, #tpu.memory_space<vmem>>, vector<2x16x64xf32>,
    %c0_39 = arith.constant 0 : index
    %c0_40 = arith.constant 0 : index
    %73 = vector.load %arg6[%c0_39, %c0_40] : memref<32x64xf32, #tpu.memory_space<vmem>>, vector<32x64xf32>
    %cst_41 = arith.constant dense<0.000000e+00> : vector<16x64xf32>
    %74 = tpu.matmul %56, %73, %cst_41 {dimension_numbers = #tpu.dot_dimension_numbers<[1], [0], [0], [1], [0, 0, 1, 1], [], []>} : vector<16x32xf32>, vector<32x64xf32>, vector<16x64xf32> -> vector<16x64xf32>
    %75 = vector.shape_cast %74 : vector<16x64xf32> to vector<2x8x64xf32>
    %c0_42 = arith.constant 0 : index
    %c16_43 = arith.constant 16 : index
    %c0_44 = arith.constant 0 : index
    %76 = vector.load %arg11[%c0_42, %c16_43, %c0_44] : memref<2x24x64xf32, #tpu.memory_space<vmem>>, vector<2x8x64xf32>
    tpu.vector_store %arg11[%c0_42, %c16_43, %c0_44], %75 {strides = array<i32>} : memref<2x24x64xf32, #tpu.memory_space<vmem>>, vector<2x8x64xf32>,
    %c0_45 = arith.constant 0 : index
    %c0_46 = arith.constant 0 : index
    %c0_47 = arith.constant 0 : index
    %77 = vector.load %arg9[%c0_45, %c0_46, %c0_47] : memref<2x8x64xf32, #tpu.memory_space<vmem>>, vector<2x8x16xf32>
    %c0_48 = arith.constant 0 : index
    %c0_49 = arith.constant 0 : index
    %c0_50 = arith.constant 0 : index
    %78 = vector.load %arg10[%c0_48, %c0_49, %c0_50] : memref<2x24x64xf32, #tpu.memory_space<vmem>>, vector<2x24x16xf32>
    %c0_51 = arith.constant 0 : index
    %c0_52 = arith.constant 0 : index
    %c0_53 = arith.constant 0 : index
    %79 = vector.load %arg11[%c0_51, %c0_52, %c0_53] : memref<2x24x64xf32, #tpu.memory_space<vmem>>, vector<2x24x16xf32>
    "tpu.trace_start"() <{level = 10 : i32, message = "bqd,bkd->bqk"}> : () -> ()
    %cst_54 = arith.constant dense<0.000000e+00> : vector<2x8x24xf32>
    %80 = tpu.matmul %77, %78, %cst_54 {dimension_numbers = #tpu.dot_dimension_numbers<[2], [2], [1], [1], [0, 0, 0, 1, 1, 1], [0], [0]>} : vector<2x8x16xf32>, vector<2x24x16xf32>, vector<2x8x24xf32> -> vector<2x8x24xf32>
    "tpu.trace_stop"() : () -> ()
    %cst_55 = arith.constant dense<0xFF800000> : vector<2x8xf32>
    %81 = vector.multi_reduction <maximumf>, %80, %cst_55 [2] : vector<2x8x24xf32> to vector<2x8xf32>
    %82 = vector.shape_cast %81 : vector<2x8xf32> to vector<2x8x1xf32>
    %83 = vector.broadcast %82 : vector<2x8x1xf32> to vector<2x8x24xf32>
    %84 = arith.subf %80, %83 : vector<2x8x24xf32>
    %85 = math.exp %84 : vector<2x8x24xf32>
    %cst_56 = arith.constant dense<0.000000e+00> : vector<2x8xf32>
    %86 = vector.multi_reduction <add>, %85, %cst_56 [2] : vector<2x8x24xf32> to vector<2x8xf32>
    %87 = vector.shape_cast %86 : vector<2x8xf32> to vector<2x8x1xf32>
    %88 = tpu.reciprocal %87 : vector<2x8x1xf32> -> vector<2x8x1xf32>
    %89 = vector.broadcast %88 : vector<2x8x1xf32> to vector<2x8x24xf32>
    %90 = arith.mulf %85, %89 : vector<2x8x24xf32>
    "tpu.trace_start"() <{level = 10 : i32, message = "bqk,bkd->bqd"}> : () -> ()
    %cst_57 = arith.constant dense<0.000000e+00> : vector<2x8x16xf32>
    %91 = tpu.matmul %90, %79, %cst_57 {dimension_numbers = #tpu.dot_dimension_numbers<[2], [1], [1], [2], [0, 0, 0, 1, 1, 2], [0], [0]>} : vector<2x8x24xf32>, vector<2x24x16xf32>, vector<2x8x16xf32> -> vector<2x8x16xf32>
    "tpu.trace_stop"() : () -> ()
    %c0_58 = arith.constant 0 : index
    %c0_59 = arith.constant 0 : index
    %c0_60 = arith.constant 0 : index
    %92 = vector.load %arg12[%c0_58, %c0_59, %c0_60] : memref<2x8x64xf32, #tpu.memory_space<vmem>>, vector<2x8x16xf32>
    tpu.vector_store %arg12[%c0_58, %c0_59, %c0_60], %91 {strides = array<i32>} : memref<2x8x64xf32, #tpu.memory_space<vmem>>, vector<2x8x16xf32>,
    %c0_61 = arith.constant 0 : index
    %c0_62 = arith.constant 0 : index
    %c16_63 = arith.constant 16 : index
    %93 = vector.load %arg9[%c0_61, %c0_62, %c16_63] : memref<2x8x64xf32, #tpu.memory_space<vmem>>, vector<2x8x16xf32>
    %c0_64 = arith.constant 0 : index
    %c0_65 = arith.constant 0 : index
    %c16_66 = arith.constant 16 : index
    %94 = vector.load %arg10[%c0_64, %c0_65, %c16_66] : memref<2x24x64xf32, #tpu.memory_space<vmem>>, vector<2x24x16xf32>
    %c0_67 = arith.constant 0 : index
    %c0_68 = arith.constant 0 : index
    %c16_69 = arith.constant 16 : index
    %95 = vector.load %arg11[%c0_67, %c0_68, %c16_69] : memref<2x24x64xf32, #tpu.memory_space<vmem>>, vector<2x24x16xf32>
    "tpu.trace_start"() <{level = 10 : i32, message = "bqd,bkd->bqk"}> : () -> ()
    %cst_70 = arith.constant dense<0.000000e+00> : vector<2x8x24xf32>
    %96 = tpu.matmul %93, %94, %cst_70 {dimension_numbers = #tpu.dot_dimension_numbers<[2], [2], [1], [1], [0, 0, 0, 1, 1, 1], [0], [0]>} : vector<2x8x16xf32>, vector<2x24x16xf32>, vector<2x8x24xf32> -> vector<2x8x24xf32>
    "tpu.trace_stop"() : () -> ()
    %cst_71 = arith.constant dense<0xFF800000> : vector<2x8xf32>
    %97 = vector.multi_reduction <maximumf>, %96, %cst_71 [2] : vector<2x8x24xf32> to vector<2x8xf32>
    %98 = vector.shape_cast %97 : vector<2x8xf32> to vector<2x8x1xf32>
    %99 = vector.broadcast %98 : vector<2x8x1xf32> to vector<2x8x24xf32>
    %100 = arith.subf %96, %99 : vector<2x8x24xf32>
    %101 = math.exp %100 : vector<2x8x24xf32>
    %cst_72 = arith.constant dense<0.000000e+00> : vector<2x8xf32>
    %102 = vector.multi_reduction <add>, %101, %cst_72 [2] : vector<2x8x24xf32> to vector<2x8xf32>
    %103 = vector.shape_cast %102 : vector<2x8xf32> to vector<2x8x1xf32>
    %104 = tpu.reciprocal %103 : vector<2x8x1xf32> -> vector<2x8x1xf32>
    %105 = vector.broadcast %104 : vector<2x8x1xf32> to vector<2x8x24xf32>
    %106 = arith.mulf %101, %105 : vector<2x8x24xf32>
    "tpu.trace_start"() <{level = 10 : i32, message = "bqk,bkd->bqd"}> : () -> ()
    %cst_73 = arith.constant dense<0.000000e+00> : vector<2x8x16xf32>
    %107 = tpu.matmul %106, %95, %cst_73 {dimension_numbers = #tpu.dot_dimension_numbers<[2], [1], [1], [2], [0, 0, 0, 1, 1, 2], [0], [0]>} : vector<2x8x24xf32>, vector<2x24x16xf32>, vector<2x8x16xf32> -> vector<2x8x16xf32>
    "tpu.trace_stop"() : () -> ()
    %c0_74 = arith.constant 0 : index
    %c0_75 = arith.constant 0 : index
    %c16_76 = arith.constant 16 : index
    %108 = vector.load %arg12[%c0_74, %c0_75, %c16_76] : memref<2x8x64xf32, #tpu.memory_space<vmem>>, vector<2x8x16xf32>
    tpu.vector_store %arg12[%c0_74, %c0_75, %c16_76], %107 {strides = array<i32>} : memref<2x8x64xf32, #tpu.memory_space<vmem>>, vector<2x8x16xf32>,
    %c0_77 = arith.constant 0 : index
    %c0_78 = arith.constant 0 : index
    %c32 = arith.constant 32 : index
    %109 = vector.load %arg9[%c0_77, %c0_78, %c32] : memref<2x8x64xf32, #tpu.memory_space<vmem>>, vector<2x8x16xf32>
    %c0_79 = arith.constant 0 : index
    %c0_80 = arith.constant 0 : index
    %c32_81 = arith.constant 32 : index
    %110 = vector.load %arg10[%c0_79, %c0_80, %c32_81] : memref<2x24x64xf32, #tpu.memory_space<vmem>>, vector<2x24x16xf32>
    %c0_82 = arith.constant 0 : index
    %c0_83 = arith.constant 0 : index
    %c32_84 = arith.constant 32 : index
    %111 = vector.load %arg11[%c0_82, %c0_83, %c32_84] : memref<2x24x64xf32, #tpu.memory_space<vmem>>, vector<2x24x16xf32>
    "tpu.trace_start"() <{level = 10 : i32, message = "bqd,bkd->bqk"}> : () -> ()
    %cst_85 = arith.constant dense<0.000000e+00> : vector<2x8x24xf32>
    %112 = tpu.matmul %109, %110, %cst_85 {dimension_numbers = #tpu.dot_dimension_numbers<[2], [2], [1], [1], [0, 0, 0, 1, 1, 1], [0], [0]>} : vector<2x8x16xf32>, vector<2x24x16xf32>, vector<2x8x24xf32> -> vector<2x8x24xf32>
    "tpu.trace_stop"() : () -> ()
    %cst_86 = arith.constant dense<0xFF800000> : vector<2x8xf32>
    %113 = vector.multi_reduction <maximumf>, %112, %cst_86 [2] : vector<2x8x24xf32> to vector<2x8xf32>
    %114 = vector.shape_cast %113 : vector<2x8xf32> to vector<2x8x1xf32>
    %115 = vector.broadcast %114 : vector<2x8x1xf32> to vector<2x8x24xf32>
    %116 = arith.subf %112, %115 : vector<2x8x24xf32>
    %117 = math.exp %116 : vector<2x8x24xf32>
    %cst_87 = arith.constant dense<0.000000e+00> : vector<2x8xf32>
    %118 = vector.multi_reduction <add>, %117, %cst_87 [2] : vector<2x8x24xf32> to vector<2x8xf32>
    %119 = vector.shape_cast %118 : vector<2x8xf32> to vector<2x8x1xf32>
    %120 = tpu.reciprocal %119 : vector<2x8x1xf32> -> vector<2x8x1xf32>
    %121 = vector.broadcast %120 : vector<2x8x1xf32> to vector<2x8x24xf32>
    %122 = arith.mulf %117, %121 : vector<2x8x24xf32>
    "tpu.trace_start"() <{level = 10 : i32, message = "bqk,bkd->bqd"}> : () -> ()
    %cst_88 = arith.constant dense<0.000000e+00> : vector<2x8x16xf32>
    %123 = tpu.matmul %122, %111, %cst_88 {dimension_numbers = #tpu.dot_dimension_numbers<[2], [1], [1], [2], [0, 0, 0, 1, 1, 2], [0], [0]>} : vector<2x8x24xf32>, vector<2x24x16xf32>, vector<2x8x16xf32> -> vector<2x8x16xf32>
    "tpu.trace_stop"() : () -> ()
    %c0_89 = arith.constant 0 : index
    %c0_90 = arith.constant 0 : index
    %c32_91 = arith.constant 32 : index
    %124 = vector.load %arg12[%c0_89, %c0_90, %c32_91] : memref<2x8x64xf32, #tpu.memory_space<vmem>>, vector<2x8x16xf32>
    tpu.vector_store %arg12[%c0_89, %c0_90, %c32_91], %123 {strides = array<i32>} : memref<2x8x64xf32, #tpu.memory_space<vmem>>, vector<2x8x16xf32>,
    %c0_92 = arith.constant 0 : index
    %c0_93 = arith.constant 0 : index
    %c48 = arith.constant 48 : index
    %125 = vector.load %arg9[%c0_92, %c0_93, %c48] : memref<2x8x64xf32, #tpu.memory_space<vmem>>, vector<2x8x16xf32>
    %c0_94 = arith.constant 0 : index
    %c0_95 = arith.constant 0 : index
    %c48_96 = arith.constant 48 : index
    %126 = vector.load %arg10[%c0_94, %c0_95, %c48_96] : memref<2x24x64xf32, #tpu.memory_space<vmem>>, vector<2x24x16xf32>
    %c0_97 = arith.constant 0 : index
    %c0_98 = arith.constant 0 : index
    %c48_99 = arith.constant 48 : index
    %127 = vector.load %arg11[%c0_97, %c0_98, %c48_99] : memref<2x24x64xf32, #tpu.memory_space<vmem>>, vector<2x24x16xf32>
    "tpu.trace_start"() <{level = 10 : i32, message = "bqd,bkd->bqk"}> : () -> ()
    %cst_100 = arith.constant dense<0.000000e+00> : vector<2x8x24xf32>
    %128 = tpu.matmul %125, %126, %cst_100 {dimension_numbers = #tpu.dot_dimension_numbers<[2], [2], [1], [1], [0, 0, 0, 1, 1, 1], [0], [0]>} : vector<2x8x16xf32>, vector<2x24x16xf32>, vector<2x8x24xf32> -> vector<2x8x24xf32>
    "tpu.trace_stop"() : () -> ()
    %cst_101 = arith.constant dense<0xFF800000> : vector<2x8xf32>
    %129 = vector.multi_reduction <maximumf>, %128, %cst_101 [2] : vector<2x8x24xf32> to vector<2x8xf32>
    %130 = vector.shape_cast %129 : vector<2x8xf32> to vector<2x8x1xf32>
    %131 = vector.broadcast %130 : vector<2x8x1xf32> to vector<2x8x24xf32>
    %132 = arith.subf %128, %131 : vector<2x8x24xf32>
    %133 = math.exp %132 : vector<2x8x24xf32>
    %cst_102 = arith.constant dense<0.000000e+00> : vector<2x8xf32>
    %134 = vector.multi_reduction <add>, %133, %cst_102 [2] : vector<2x8x24xf32> to vector<2x8xf32>
    %135 = vector.shape_cast %134 : vector<2x8xf32> to vector<2x8x1xf32>
    %136 = tpu.reciprocal %135 : vector<2x8x1xf32> -> vector<2x8x1xf32>
    %137 = vector.broadcast %136 : vector<2x8x1xf32> to vector<2x8x24xf32>
    %138 = arith.mulf %133, %137 : vector<2x8x24xf32>
    "tpu.trace_start"() <{level = 10 : i32, message = "bqk,bkd->bqd"}> : () -> ()
    %cst_103 = arith.constant dense<0.000000e+00> : vector<2x8x16xf32>
    %139 = tpu.matmul %138, %127, %cst_103 {dimension_numbers = #tpu.dot_dimension_numbers<[2], [1], [1], [2], [0, 0, 0, 1, 1, 2], [0], [0]>} : vector<2x8x24xf32>, vector<2x24x16xf32>, vector<2x8x16xf32> -> vector<2x8x16xf32>
    "tpu.trace_stop"() : () -> ()
    %c0_104 = arith.constant 0 : index
    %c0_105 = arith.constant 0 : index
    %c48_106 = arith.constant 48 : index
    %140 = vector.load %arg12[%c0_104, %c0_105, %c48_106] : memref<2x8x64xf32, #tpu.memory_space<vmem>>, vector<2x8x16xf32>
    tpu.vector_store %arg12[%c0_104, %c0_105, %c48_106], %139 {strides = array<i32>} : memref<2x8x64xf32, #tpu.memory_space<vmem>>, vector<2x8x16xf32>,
    %c0_107 = arith.constant 0 : index
    %c0_108 = arith.constant 0 : index
    %c0_109 = arith.constant 0 : index
    %141 = vector.load %arg12[%c0_107, %c0_108, %c0_109] : memref<2x8x64xf32, #tpu.memory_space<vmem>>, vector<2x8x64xf32>
    %142 = vector.shape_cast %141 : vector<2x8x64xf32> to vector<16x64xf32>
    %c0_110 = arith.constant 0 : index
    %c0_111 = arith.constant 0 : index
    %143 = vector.load %arg7[%c0_110, %c0_111] : memref<64x32xf32, #tpu.memory_space<vmem>>, vector<64x32xf32>
    %cst_112 = arith.constant dense<0.000000e+00> : vector<16x32xf32>
    %144 = tpu.matmul %142, %143, %cst_112 {dimension_numbers = #tpu.dot_dimension_numbers<[1], [0], [0], [1], [0, 0, 1, 1], [], []>} : vector<16x64xf32>, vector<64x32xf32>, vector<16x32xf32> -> vector<16x32xf32>
    %145 = vector.shape_cast %144 : vector<16x32xf32> to vector<2x8x32xf32>
    %c0_113 = arith.constant 0 : index
    %c0_114 = arith.constant 0 : index
    %c0_115 = arith.constant 0 : index
    %146 = vector.load %arg8[%c0_113, %c0_114, %c0_115] : memref<2x8x32xf32, #tpu.memory_space<vmem>>, vector<2x8x32xf32>
    tpu.vector_store %arg8[%c0_113, %c0_114, %c0_115], %145 {strides = array<i32>} : memref<2x8x32xf32, #tpu.memory_space<vmem>>, vector<2x8x32xf32>,
    return
  }
  func.func @transform_0(%arg0: i32) -> (i32, i32, i32) {
    %c0_i32 = arith.constant 0 : i32
    %c0_i32_0 = arith.constant 0 : i32
    %c0_i32_1 = arith.constant 0 : i32
    return %arg0, %c0_i32, %c0_i32_0 : i32, i32, i32
  }
  func.func @transform_1(%arg0: i32) -> (i32, i32, i32) {
    %c0_i32 = arith.constant 0 : i32
    %c0_i32_0 = arith.constant 0 : i32
    %c0_i32_1 = arith.constant 0 : i32
    return %arg0, %c0_i32, %c0_i32_0 : i32, i32, i32
  }
  func.func @transform_2(%arg0: i32) -> (i32, i32) {
    %c0_i32 = arith.constant 0 : i32
    %c0_i32_0 = arith.constant 0 : i32
    %c0_i32_1 = arith.constant 0 : i32
    return %c0_i32, %c0_i32_0 : i32, i32
  }
  func.func @transform_3(%arg0: i32) -> (i32, i32) {
    %c0_i32 = arith.constant 0 : i32
    %c0_i32_0 = arith.constant 0 : i32
    %c0_i32_1 = arith.constant 0 : i32
    return %c0_i32, %c0_i32_0 : i32, i32
  }
  func.func @transform_4(%arg0: i32) -> (i32, i32) {
    %c0_i32 = arith.constant 0 : i32
    %c0_i32_0 = arith.constant 0 : i32
    %c0_i32_1 = arith.constant 0 : i32
    return %c0_i32, %c0_i32_0 : i32, i32
  }
  func.func @transform_5(%arg0: i32) -> (i32, i32) {
    %c0_i32 = arith.constant 0 : i32
    %c0_i32_0 = arith.constant 0 : i32
    %c0_i32_1 = arith.constant 0 : i32
    return %c0_i32, %c0_i32_0 : i32, i32
  }
  func.func @transform_6(%arg0: i32) -> (i32, i32) {
    %c0_i32 = arith.constant 0 : i32
    %c0_i32_0 = arith.constant 0 : i32
    %c0_i32_1 = arith.constant 0 : i32
    return %c0_i32, %c0_i32_0 : i32, i32
  }
  func.func @transform_7(%arg0: i32) -> (i32, i32, i32) {
    %c0_i32 = arith.constant 0 : i32
    %c0_i32_0 = arith.constant 0 : i32
    %c0_i32_1 = arith.constant 0 : i32
    return %arg0, %c0_i32, %c0_i32_0 : i32, i32, i32
  }
}

</mosaic_0001>

<llo_original>
// kernel: tpu_custom_call.1
$region0: #{tpu_custom_call.1}
  #allocation0 [shape = 'u32[]', space=smem, size = 0x4, offset = 0x4, fixed_abs, tag = 'smem constant byte address 0x4 - core index']
  #allocation1 [shape = 'u32[72,128]{1,0:T(1,128)}', space=vmem, size = 0x9000, scoped, tag = 'internal scratch']
  #allocation2 [shape = 'f32[2,8,64]{2,1,0:T(8,128)}', space=vmem, size = 0x2000, scoped, tag = 'scratch operand']
  #allocation3 [shape = 'f32[2,24,64]{2,1,0:T(8,128)}', space=vmem, size = 0x6000, scoped, tag = 'scratch operand']
  #allocation4 [shape = 'f32[2,24,64]{2,1,0:T(8,128)}', space=vmem, size = 0x6000, scoped, tag = 'scratch operand']
  #allocation5 [shape = 'f32[2,8,64]{2,1,0:T(8,128)}', space=vmem, size = 0x2000, scoped, tag = 'scratch operand']
  %s0 = inlined_call_operand.vmem [shape: f32[4,16,32], index: 0, kind: input, shape index: {}]
  %s1 = inlined_call_operand.vmem [shape: f32[4,8,32], index: 1, kind: input, shape index: {}]
  %s2 = inlined_call_operand.hbm [shape: f32[4,32], index: 2, kind: input, shape index: {}]
  %s3 = inlined_call_operand.hbm [shape: f32[32,64], index: 3, kind: input, shape index: {}]
  %s4 = inlined_call_operand.hbm [shape: f32[32,64], index: 4, kind: input, shape index: {}]
  %s5 = inlined_call_operand.hbm [shape: f32[32,64], index: 5, kind: input, shape index: {}]
  %s6 = inlined_call_operand.vmem [shape: f32[64,32], index: 6, kind: input, shape index: {}]
  %s7 = inlined_call_operand.hbm [shape: f32[4,8,32], index: 7, kind: output, shape index: {}]
  %s8 = sld [smem:[#allocation0]]
  $region77: #{tpu_custom_call.1} parent=0
    _
  %s10 = ssub.s32 1, %s8
  %s11 = scalar_select 0, %s10, %s8
  $region1: #{tpu_custom_call.1} parent=0
    #allocation6 [shape = 'u8[2048]{0}', space=vmem, size = 0x800, scoped, tag = 'input window, operand 2, single buffered']
    #allocation7 [shape = 's32[2]{0}', space=sflag, size = 0x8, scoped, tag = 'scoped memory for tpu_custom_call.1']
    #allocation8 [shape = 's32[2]{0}', space=sflag, size = 0x8, scoped, tag = 'scoped memory for tpu_custom_call.1']
    #allocation9 [shape = 'u8[16384]{0}', space=vmem, size = 0x4000, scoped, tag = 'input window, operand 3, single buffered']
    #allocation10 [shape = 's32[1]{0}', space=sflag, size = 0x4, scoped, tag = 'scoped memory for tpu_custom_call.1']
    #allocation11 [shape = 'u8[16384]{0}', space=vmem, size = 0x4000, scoped, tag = 'input window, operand 4, single buffered']
    #allocation12 [shape = 'u8[16384]{0}', space=vmem, size = 0x4000, scoped, tag = 'input window, operand 5, single buffered']
    #allocation13 [shape = 's32[1]{0}', space=sflag, size = 0x4, scoped, tag = 'scoped memory for tpu_custom_call.1']
    #allocation14 [shape = 'u8[16384]{0}', space=vmem, size = 0x4000, scoped, tag = 'output window, operand 0']
    %12 = vsyncpa [#allocation7], 0
    %13 = vsyncpa [#allocation10], 0
    %14 = vsyncpa [#allocation13], 0
    %15 = vsyncpa [#allocation8], 0
    %s16 = scalar_lea.sflag [#allocation8], 1
    %17 = vsyncpa %s16, 0
    loop: start=0, step=1, limit=4
    $region2: #{tpu_custom_call.1} parent=1 // loop_pre_header
      _
    $region3: #{tpu_custom_call.1} parent=1 // loop_header
      %s19 = sphi 0, %s23
      %p20 = scmp.ge.s32.totalorder %s19, 4
      %s29 = sphi 0, %s31
      %s32 = sphi 0, %s29
      %s33 = sphi 0, %s32
      %s49 = sphi 0, %s33
      %s55 = sphi 0, %s57
      %s58 = sphi 0, %s55
      %s59 = sphi 0, %s58
      %s75 = sphi 0, %s59
      %s79 = sphi 0, %s79
      %s81 = sphi 0, %s79
      %s82 = sphi 0, %s81
      %s96 = sphi 0, %s82
      %s100 = sphi 0, %s100
      %s102 = sphi 0, %s100
      %s103 = sphi 0, %s102
      %s117 = sphi 0, %s103
      %s121 = sphi 0, %s121
      %s123 = sphi 0, %s121
      %s124 = sphi 0, %s123
      %s138 = sphi 0, %s124
      %s142 = sphi 0, %s142
      %s144 = sphi 0, %s142
      %s145 = sphi 0, %s144
      %s159 = sphi 0, %s145
      %s163 = sphi 0, %s163
      %s165 = sphi 0, %s163
      %s166 = sphi 0, %s165
      %s180 = sphi 0, %s166
      %s186 = sphi 0, %s188
      %s189 = sphi 0, %s186
      %s190 = sphi 0, %s189
      %s206 = sphi 0, %s190
    $region4: #{tpu_custom_call.1} parent=1 // loop_header_branch
      %22 = sbr.rel (%p20) target = $region8
    $region5: #{tpu_custom_call.1} parent=1 // loop_body
      %s24 = ssub.s32 %s19, 1
      %s25 = ssub.s32 %s19, 2
      %s26 = sadd.s32 %s19, 1
      %s27 = ssub.s32 %s19, %s26
      %p28 = scmp.eq.s32.totalorder %s27, 0
      %s30 = sadd.s32 %s29, 1
      %s31 = scalar_select %p28, %s29, %s30
      %p34 = pneg %p28
      %p35 = scmp.eq.s32.totalorder %s19, 1
      %p36 = por %p34, %p35
      %p37 = scmp.ne.s32.totalorder %s29, %s32
      %p38 = scmp.eq.s32.totalorder %s19, 0
      %p39 = por %p37, %p38
      %p40 = scmp.ne.s32.totalorder %s29, %s32
      %p41 = scmp.eq.s32.totalorder %s24, 1
      %p42 = por %p40, %p41
      %p43 = scmp.ne.s32.totalorder %s32, %s33
      %p44 = scmp.eq.s32.totalorder %s24, 0
      %p45 = por %p43, %p44
      %p46 = scmp.ne.s32.totalorder %s32, %s33
      %p47 = scmp.eq.s32.totalorder %s25, 1
      %p48 = por %p46, %p47
      %p50 = scmp.ne.s32.totalorder %s33, %s49
      %p51 = scmp.eq.s32.totalorder %s25, 0
      %p52 = por %p50, %p51
      %s53 = ssub.s32 %s19, %s26
      %p54 = scmp.eq.s32.totalorder %s53, 0
      %s56 = sadd.s32 %s55, 1
      %s57 = scalar_select %p54, %s55, %s56
      %p60 = pneg %p54
      %p61 = scmp.eq.s32.totalorder %s19, 1
      %p62 = por %p60, %p61
      %p63 = scmp.ne.s32.totalorder %s55, %s58
      %p64 = scmp.eq.s32.totalorder %s19, 0
      %p65 = por %p63, %p64
      %p66 = scmp.ne.s32.totalorder %s55, %s58
      %p67 = scmp.eq.s32.totalorder %s24, 1
      %p68 = por %p66, %p67
      %p69 = scmp.ne.s32.totalorder %s58, %s59
      %p70 = scmp.eq.s32.totalorder %s24, 0
      %p71 = por %p69, %p70
      %p72 = scmp.ne.s32.totalorder %s58, %s59
      %p73 = scmp.eq.s32.totalorder %s25, 1
      %p74 = por %p72, %p73
      %p76 = scmp.ne.s32.totalorder %s59, %s75
      %p77 = scmp.eq.s32.totalorder %s25, 0
      %p78 = por %p76, %p77
      %s80 = sadd.s32 %s79, 1
      %p83 = scmp.eq.s32.totalorder %s19, 1
      %p84 = scmp.ne.s32.totalorder %s79, %s81
      %p85 = scmp.eq.s32.totalorder %s19, 0
      %p86 = por %p84, %p85
      %p87 = scmp.ne.s32.totalorder %s79, %s81
      %p88 = scmp.eq.s32.totalorder %s24, 1
      %p89 = por %p87, %p88
      %p90 = scmp.ne.s32.totalorder %s81, %s82
      %p91 = scmp.eq.s32.totalorder %s24, 0
      %p92 = por %p90, %p91
      %p93 = scmp.ne.s32.totalorder %s81, %s82
      %p94 = scmp.eq.s32.totalorder %s25, 1
      %p95 = por %p93, %p94
      %p97 = scmp.ne.s32.totalorder %s82, %s96
      %p98 = scmp.eq.s32.totalorder %s25, 0
      %p99 = por %p97, %p98
      %s101 = sadd.s32 %s100, 1
      %p104 = scmp.eq.s32.totalorder %s19, 1
      %p105 = scmp.ne.s32.totalorder %s100, %s102
      %p106 = scmp.eq.s32.totalorder %s19, 0
      %p107 = por %p105, %p106
      %p108 = scmp.ne.s32.totalorder %s100, %s102
      %p109 = scmp.eq.s32.totalorder %s24, 1
      %p110 = por %p108, %p109
      %p111 = scmp.ne.s32.totalorder %s102, %s103
      %p112 = scmp.eq.s32.totalorder %s24, 0
      %p113 = por %p111, %p112
      %p114 = scmp.ne.s32.totalorder %s102, %s103
      %p115 = scmp.eq.s32.totalorder %s25, 1
      %p116 = por %p114, %p115
      %p118 = scmp.ne.s32.totalorder %s103, %s117
      %p119 = scmp.eq.s32.totalorder %s25, 0
      %p120 = por %p118, %p119
      %s122 = sadd.s32 %s121, 1
      %p125 = scmp.eq.s32.totalorder %s19, 1
      %p126 = scmp.ne.s32.totalorder %s121, %s123
      %p127 = scmp.eq.s32.totalorder %s19, 0
      %p128 = por %p126, %p127
      %p129 = scmp.ne.s32.totalorder %s121, %s123
      %p130 = scmp.eq.s32.totalorder %s24, 1
      %p131 = por %p129, %p130
      %p132 = scmp.ne.s32.totalorder %s123, %s124
      %p133 = scmp.eq.s32.totalorder %s24, 0
      %p134 = por %p132, %p133
      %p135 = scmp.ne.s32.totalorder %s123, %s124
      %p136 = scmp.eq.s32.totalorder %s25, 1
      %p137 = por %p135, %p136
      %p139 = scmp.ne.s32.totalorder %s124, %s138
      %p140 = scmp.eq.s32.totalorder %s25, 0
      %p141 = por %p139, %p140
      %s143 = sadd.s32 %s142, 1
      %p146 = scmp.eq.s32.totalorder %s19, 1
      %p147 = scmp.ne.s32.totalorder %s142, %s144
      %p148 = scmp.eq.s32.totalorder %s19, 0
      %p149 = por %p147, %p148
      %p150 = scmp.ne.s32.totalorder %s142, %s144
      %p151 = scmp.eq.s32.totalorder %s24, 1
      %p152 = por %p150, %p151
      %p153 = scmp.ne.s32.totalorder %s144, %s145
      %p154 = scmp.eq.s32.totalorder %s24, 0
      %p155 = por %p153, %p154
      %p156 = scmp.ne.s32.totalorder %s144, %s145
      %p157 = scmp.eq.s32.totalorder %s25, 1
      %p158 = por %p156, %p157
      %p160 = scmp.ne.s32.totalorder %s145, %s159
      %p161 = scmp.eq.s32.totalorder %s25, 0
      %p162 = por %p160, %p161
      %s164 = sadd.s32 %s163, 1
      %p167 = scmp.eq.s32.totalorder %s19, 1
      %p168 = scmp.ne.s32.totalorder %s163, %s165
      %p169 = scmp.eq.s32.totalorder %s19, 0
      %p170 = por %p168, %p169
      %p171 = scmp.ne.s32.totalorder %s163, %s165
      %p172 = scmp.eq.s32.totalorder %s24, 1
      %p173 = por %p171, %p172
      %p174 = scmp.ne.s32.totalorder %s165, %s166
      %p175 = scmp.eq.s32.totalorder %s24, 0
      %p176 = por %p174, %p175
      %p177 = scmp.ne.s32.totalorder %s165, %s166
      %p178 = scmp.eq.s32.totalorder %s25, 1
      %p179 = por %p177, %p178
      %p181 = scmp.ne.s32.totalorder %s166, %s180
      %p182 = scmp.eq.s32.totalorder %s25, 0
      %p183 = por %p181, %p182
      %s184 = ssub.s32 %s19, %s26
      %p185 = scmp.eq.s32.totalorder %s184, 0
      %s187 = sadd.s32 %s186, 1
      %s188 = scalar_select %p185, %s186, %s187
      %p191 = pneg %p185
      %p192 = scmp.eq.s32.totalorder %s19, 1
      %p193 = por %p191, %p192
      %p194 = scmp.ne.s32.totalorder %s186, %s189
      %p195 = scmp.eq.s32.totalorder %s19, 0
      %p196 = por %p194, %p195
      %p197 = scmp.ne.s32.totalorder %s186, %s189
      %p198 = scmp.eq.s32.totalorder %s24, 1
      %p199 = por %p197, %p198
      %p200 = scmp.ne.s32.totalorder %s189, %s190
      %p201 = scmp.eq.s32.totalorder %s24, 0
      %p202 = por %p200, %p201
      %p203 = scmp.ne.s32.totalorder %s189, %s190
      %p204 = scmp.eq.s32.totalorder %s25, 1
      %p205 = por %p203, %p204
      %p207 = scmp.ne.s32.totalorder %s190, %s206
      %p208 = scmp.eq.s32.totalorder %s25, 0
      %p209 = por %p207, %p208
      %p210 = scmp.le.s32.totalorder 1, %s19
      %p211 = scmp.lt.s32.totalorder %s19, 3
      %p212 = pnand %p210, %p211
      %p213 = pneg %p212
      // Predicated region
      $region9: #{tpu_custom_call.1} parent=5 // pred_check
        _
      $region10: #{tpu_custom_call.1} parent=5 // pred_check_branch
        %215 = sbr.rel (%p212) target = $region12
      $region11: #{tpu_custom_call.1} parent=5 // pred_region
        %s216 = ssub.s32 %s19, 1
        // Predicated region
        $region13: #{tpu_custom_call.1} parent=11 // pred_check
          %p217 = pneg %p92
        $region14: #{tpu_custom_call.1} parent=11 // pred_check_branch
          %219 = sbr.rel (%p217) target = $region16
        $region15: #{tpu_custom_call.1} parent=11 // pred_region
          %221 = vsyncadd [#allocation7], 0
          %s223 = sshll.u32 %s2, 4
          %s224 = int_to_ptr.hbm [resolvable:$true] %s223
          %s225 = sshll.u32 [#allocation6], 4
          %s226 = int_to_ptr.vmem [resolvable:$true] %s225
          %228 = dma.hbm_to_vmem [thread:$0]  %s224, 64, %s226, [#allocation7]
        $region16: #{tpu_custom_call.1} parent=11 // pred_fallthru
          _
        // Predicated region
        $region17: #{tpu_custom_call.1} parent=11 // pred_check
          %p229 = pneg %p113
        $region18: #{tpu_custom_call.1} parent=11 // pred_check_branch
          %231 = sbr.rel (%p229) target = $region20
        $region19: #{tpu_custom_call.1} parent=11 // pred_region
          %233 = vsyncadd [#allocation10], 0
          %s234 = sshll.u32 %s3, 4
          %s235 = int_to_ptr.hbm [resolvable:$true] %s234
          %s236 = sshll.u32 [#allocation9], 4
          %s237 = int_to_ptr.vmem [resolvable:$true] %s236
          %242 = dma.hbm_to_vmem [thread:$0]  %s235, 512, %s237, [#allocation10], 128, 128, 8
        $region20: #{tpu_custom_call.1} parent=11 // pred_fallthru
          _
        // Predicated region
        $region21: #{tpu_custom_call.1} parent=11 // pred_check
          %p243 = pneg %p134
        $region22: #{tpu_custom_call.1} parent=11 // pred_check_branch
          %245 = sbr.rel (%p243) target = $region24
        $region23: #{tpu_custom_call.1} parent=11 // pred_region
          %247 = vsyncadd [#allocation10], 0
          %s248 = sshll.u32 %s4, 4
          %s249 = int_to_ptr.hbm [resolvable:$true] %s248
          %s250 = sshll.u32 [#allocation11], 4
          %s251 = int_to_ptr.vmem [resolvable:$true] %s250
          %256 = dma.hbm_to_vmem [thread:$0]  %s249, 512, %s251, [#allocation10], 128, 128, 8
        $region24: #{tpu_custom_call.1} parent=11 // pred_fallthru
          _
        // Predicated region
        $region25: #{tpu_custom_call.1} parent=11 // pred_check
          %p257 = pneg %p155
        $region26: #{tpu_custom_call.1} parent=11 // pred_check_branch
          %259 = sbr.rel (%p257) target = $region28
        $region27: #{tpu_custom_call.1} parent=11 // pred_region
          %261 = vsyncadd [#allocation13], 0
          %s262 = sshll.u32 %s5, 4
          %s263 = int_to_ptr.hbm [resolvable:$true] %s262
          %s264 = sshll.u32 [#allocation12], 4
          %s265 = int_to_ptr.vmem [resolvable:$true] %s264
          %270 = dma.hbm_to_vmem [thread:$0]  %s263, 512, %s265, [#allocation13], 128, 128, 8
        $region28: #{tpu_custom_call.1} parent=11 // pred_fallthru
          _
        // Predicated region
        $region29: #{tpu_custom_call.1} parent=11 // pred_check
          %p271 = pneg %p176
        $region30: #{tpu_custom_call.1} parent=11 // pred_check_branch
          %273 = sbr.rel (%p271) target = $region32
        $region31: #{tpu_custom_call.1} parent=11 // pred_region
          _
        $region32: #{tpu_custom_call.1} parent=11 // pred_fallthru
          _
      $region12: #{tpu_custom_call.1} parent=5 // pred_fallthru
        _
      %p274 = scmp.lt.s32.totalorder %s19, 2
      // Predicated region
      $region33: #{tpu_custom_call.1} parent=5 // pred_check
        %p275 = pneg %p274
      $region34: #{tpu_custom_call.1} parent=5 // pred_check_branch
        %277 = sbr.rel (%p275) target = $region36
      $region35: #{tpu_custom_call.1} parent=5 // pred_region
        // Predicated region
        $region37: #{tpu_custom_call.1} parent=35 // pred_check
          %p278 = pneg %p39
        $region38: #{tpu_custom_call.1} parent=35 // pred_check_branch
          %280 = sbr.rel (%p278) target = $region40
        $region39: #{tpu_custom_call.1} parent=35 // pred_region
          %s281 = smul.u32 2, %s19
          %p282 = scmp.lt.s32.totalorder %s281, 3
          %s283 = scalar_select %p282, %s281, 3
          %s284 = smul.addr %s283, 2
          %s285 = smul.addr %s284, 8
          %s286 = scalar_lea.vmem %s0, %s285
          %s287 = smul.u32 2, %s19
        $region40: #{tpu_custom_call.1} parent=35 // pred_fallthru
          _
        // Predicated region
        $region41: #{tpu_custom_call.1} parent=35 // pred_check
          %p288 = pneg %p65
        $region42: #{tpu_custom_call.1} parent=35 // pred_check_branch
          %290 = sbr.rel (%p288) target = $region44
        $region43: #{tpu_custom_call.1} parent=35 // pred_region
          %s291 = smul.u32 2, %s19
          %p292 = scmp.lt.s32.totalorder %s291, 3
          %s293 = scalar_select %p292, %s291, 3
          %s294 = smul.addr %s293, 8
          %s295 = scalar_lea.vmem %s1, %s294
          %s296 = smul.u32 2, %s19
        $region44: #{tpu_custom_call.1} parent=35 // pred_fallthru
          _
      $region36: #{tpu_custom_call.1} parent=5 // pred_fallthru
        _
      %p297 = scmp.le.s32.totalorder 1, %s19
      %p298 = scmp.lt.s32.totalorder %s19, 3
      %p299 = pnand %p297, %p298
      %p300 = pneg %p299
      // Predicated region
      $region45: #{tpu_custom_call.1} parent=5 // pred_check
        _
      $region46: #{tpu_custom_call.1} parent=5 // pred_check_branch
        %302 = sbr.rel (%p299) target = $region48
      $region47: #{tpu_custom_call.1} parent=5 // pred_region
        %s303 = ssub.s32 %s19, 1
        // Predicated region
        $region49: #{tpu_custom_call.1} parent=47 // pred_check
          %p304 = pneg %p92
        $region50: #{tpu_custom_call.1} parent=47 // pred_check_branch
          %306 = sbr.rel (%p304) target = $region52
        $region51: #{tpu_custom_call.1} parent=47 // pred_region
          %308 = dma.done [#allocation7], 64
        $region52: #{tpu_custom_call.1} parent=47 // pred_fallthru
          _
        // Predicated region
        $region53: #{tpu_custom_call.1} parent=47 // pred_check
          %p309 = pneg %p113
        $region54: #{tpu_custom_call.1} parent=47 // pred_check_branch
          %311 = sbr.rel (%p309) target = $region56
        $region55: #{tpu_custom_call.1} parent=47 // pred_region
          %313 = dma.done [#allocation10], 512
        $region56: #{tpu_custom_call.1} parent=47 // pred_fallthru
          _
        // Predicated region
        $region57: #{tpu_custom_call.1} parent=47 // pred_check
          %p314 = pneg %p134
        $region58: #{tpu_custom_call.1} parent=47 // pred_check_branch
          %316 = sbr.rel (%p314) target = $region60
        $region59: #{tpu_custom_call.1} parent=47 // pred_region
          %318 = dma.done [#allocation10], 512
        $region60: #{tpu_custom_call.1} parent=47 // pred_fallthru
          _
        // Predicated region
        $region61: #{tpu_custom_call.1} parent=47 // pred_check
          %p319 = pneg %p155
        $region62: #{tpu_custom_call.1} parent=47 // pred_check_branch
          %321 = sbr.rel (%p319) target = $region64
        $region63: #{tpu_custom_call.1} parent=47 // pred_region
          %323 = dma.done [#allocation13], 512
        $region64: #{tpu_custom_call.1} parent=47 // pred_fallthru
          _
        %s324 = smul.u32 2, %s24
        %p325 = scmp.lt.s32.totalorder %s324, 3
        %s326 = scalar_select %p325, %s324, 3
        %s327 = smul.addr %s326, 2
        %s328 = smul.addr %s327, 8
        %s329 = scalar_lea.vmem %s0, %s328
        %p330 = pneg %p45
        %p331 = pneg %p42
        %s332 = smul.u32 2, %s24
        %p333 = scmp.lt.s32.totalorder %s332, 3
        %s334 = scalar_select %p333, %s332, 3
        %s335 = smul.addr %s334, 8
        %s336 = scalar_lea.vmem %s1, %s335
        %p337 = pneg %p71
        %p338 = pneg %p68
        %p339 = pneg %p92
        %p340 = pneg %p89
        %p341 = pneg %p113
        %p342 = pneg %p110
        %p343 = pneg %p134
        %p344 = pneg %p131
        %p345 = pneg %p155
        %p346 = pneg %p152
        %p347 = pneg %p176
        %p348 = pneg %p173
        %p349 = pneg %p202
        %p350 = pneg %p199
        %s351 = sand.u32 %s189, 1
        %s352 = scalar_lea.sflag [#allocation8], %s351
        %s353 = sand.u32 %s189, 1
        %s354 = smul.addr %s353, 16
        %s355 = scalar_lea.vmem [#allocation14], %s354
        %s356 = smul.u32 2, %s24
        %p357 = scmp.lt.s32.totalorder %s356, 3
        %s358 = scalar_select %p357, %s356, 3
        %s359 = smul.addr %s358, 2
        %s360 = smul.addr %s359, 8
        %s361 = scalar_lea.vmem %s0, %s360
        %s362 = smul.u32 2, %s24
        %s363 = smul.u32 2, %s24
        %p364 = scmp.lt.s32.totalorder %s363, 3
        %s365 = scalar_select %p364, %s363, 3
        %s366 = smul.addr %s365, 8
        %s367 = scalar_lea.vmem %s1, %s366
        %s368 = smul.u32 2, %s24
        %s369 = smul.u32 2, %s24
        %v370 = vld [vmem:[#allocation6] sm:$0xf]
        %v371 = vld [vmem:[%s361] sm:$0xff]
        %v372 = vld [vmem:[%s361 + $0x8] sm:$0xff]
        %v373 = vld [vmem:[%s361 + $0x10] sm:$0xff]
        %v374 = vld [vmem:[%s361 + $0x18] sm:$0xff]
        %v375 = vld [vmem:[%s367] sm:$0xff]
        %v376 = vld [vmem:[%s367 + $0x8] sm:$0xff]
        %vm377 = vcmask 261120
        %v378 = vsel %vm377, %v371, 0.0
        %379 = vadd.xlane.f32.xlu0 %v378
        %v380 = vpop.xlane.xlu0 %379
        %v381 = vsel %vm377, %v372, 0.0
        %382 = vadd.xlane.f32.xlu0 %v381
        %v383 = vpop.xlane.xlu0 %382
        %v384 = vsel %vm377, %v373, 0.0
        %385 = vadd.xlane.f32.xlu0 %v384
        %v386 = vpop.xlane.xlu0 %385
        %v387 = vsel %vm377, %v374, 0.0
        %388 = vadd.xlane.f32.xlu0 %v387
        %v389 = vpop.xlane.xlu0 %388
        %v390 = vrcp.pop 32.0
        %v391 = vmul.f32 32.0, %v390
        %v392 = vsub.f32 1.0, %v391
        %v393 = vmul.f32 %v390, %v392
        %v394 = vadd.f32 %v390, %v393
        %vm395 = vweird.f32 %v390
        %v396 = vsel %vm395, %v390, %v394
        %v397 = vmul.f32 %v380, %v396
        %v398 = vmul.f32 %v383, %v396
        %v399 = vmul.f32 %v386, %v396
        %v400 = vmul.f32 %v389, %v396
        %v401 = vsub.f32 %v371, %v397
        %v402 = vsub.f32 %v372, %v398
        %v403 = vsub.f32 %v373, %v399
        %v404 = vsub.f32 %v374, %v400
        %v405 = vmul.f32 %v401, %v401
        %v406 = vmul.f32 %v402, %v402
        %v407 = vmul.f32 %v403, %v403
        %v408 = vmul.f32 %v404, %v404
        %v409 = vsel %vm377, %v405, 0.0
        %410 = vadd.xlane.f32.xlu0 %v409
        %v411 = vpop.xlane.xlu0 %410
        %v412 = vsel %vm377, %v406, 0.0
        %413 = vadd.xlane.f32.xlu0 %v412
        %v414 = vpop.xlane.xlu0 %413
        %v415 = vsel %vm377, %v407, 0.0
        %416 = vadd.xlane.f32.xlu0 %v415
        %v417 = vpop.xlane.xlu0 %416
        %v418 = vsel %vm377, %v408, 0.0
        %419 = vadd.xlane.f32.xlu0 %v418
        %v420 = vpop.xlane.xlu0 %419
        %v421 = vmul.f32 %v411, %v396
        %v422 = vmul.f32 %v414, %v396
        %v423 = vmul.f32 %v417, %v396
        %v424 = vmul.f32 %v420, %v396
        %v425 = vadd.f32 %v421, 1e-05
        %v426 = vadd.f32 %v422, 1e-05
        %v427 = vadd.f32 %v423, 1e-05
        %v428 = vadd.f32 %v424, 1e-05
        %v429 = vrsqrt.pop %v425
        %v430 = vmul.f32 %v429, %v425
        %v431 = vmul.f32 %v430, %v429
        %v432 = vmul.f32 0.5, %v431
        %v433 = vsub.f32 1.5, %v432
        %v434 = vmul.f32 %v429, %v433
        %vm435 = vweird.f32 %v425
        %vm436 = vweird.f32 %v429
        %vm437 = vmor %vm435, %vm436
        %v438 = vsel %vm437, %v429, %v434
        %v439 = vrsqrt.pop %v426
        %v440 = vmul.f32 %v439, %v426
        %v441 = vmul.f32 %v440, %v439
        %v442 = vmul.f32 0.5, %v441
        %v443 = vsub.f32 1.5, %v442
        %v444 = vmul.f32 %v439, %v443
        %vm445 = vweird.f32 %v426
        %vm446 = vweird.f32 %v439
        %vm447 = vmor %vm445, %vm446
        %v448 = vsel %vm447, %v439, %v444
        %v449 = vrsqrt.pop %v427
        %v450 = vmul.f32 %v449, %v427
        %v451 = vmul.f32 %v450, %v449
        %v452 = vmul.f32 0.5, %v451
        %v453 = vsub.f32 1.5, %v452
        %v454 = vmul.f32 %v449, %v453
        %vm455 = vweird.f32 %v427
        %vm456 = vweird.f32 %v449
        %vm457 = vmor %vm455, %vm456
        %v458 = vsel %vm457, %v449, %v454
        %v459 = vrsqrt.pop %v428
        %v460 = vmul.f32 %v459, %v428
        %v461 = vmul.f32 %v460, %v459
        %v462 = vmul.f32 0.5, %v461
        %v463 = vsub.f32 1.5, %v462
        %v464 = vmul.f32 %v459, %v463
        %vm465 = vweird.f32 %v428
        %vm466 = vweird.f32 %v459
        %vm467 = vmor %vm465, %vm466
        %v468 = vsel %vm467, %v459, %v464
        %v469 = vmul.f32 %v401, %v438
        %v470 = vmul.f32 %v402, %v448
        %v471 = vmul.f32 %v403, %v458
        %v472 = vmul.f32 %v404, %v468
        %v473 = vperm.slane %v370, 0
        %v474 = vmul.f32 %v469, %v473
        %v475 = vmul.f32 %v470, %v473
        %v476 = vmul.f32 %v471, %v473
        %v477 = vmul.f32 %v472, %v473
        %v478 = vperm.slane %v370, 1
        %v479 = vadd.f32 %v474, %v478
        %v480 = vadd.f32 %v475, %v478
        %v481 = vadd.f32 %v476, %v478
        %v482 = vadd.f32 %v477, %v478
        %v483 = vsel %vm377, %v375, 0.0
        %484 = vadd.xlane.f32.xlu0 %v483
        %v485 = vpop.xlane.xlu0 %484
        %v486 = vsel %vm377, %v376, 0.0
        %487 = vadd.xlane.f32.xlu0 %v486
        %v488 = vpop.xlane.xlu0 %487
        %v489 = vmul.f32 %v485, %v396
        %v490 = vmul.f32 %v488, %v396
        %v491 = vsub.f32 %v375, %v489
        %v492 = vsub.f32 %v376, %v490
        %v493 = vmul.f32 %v491, %v491
        %v494 = vmul.f32 %v492, %v492
        %v495 = vsel %vm377, %v493, 0.0
        %496 = vadd.xlane.f32.xlu0 %v495
        %v497 = vpop.xlane.xlu0 %496
        %v498 = vsel %vm377, %v494, 0.0
        %499 = vadd.xlane.f32.xlu0 %v498
        %v500 = vpop.xlane.xlu0 %499
        %v501 = vmul.f32 %v497, %v396
        %v502 = vmul.f32 %v500, %v396
        %v503 = vadd.f32 %v501, 1e-05
        %v504 = vadd.f32 %v502, 1e-05
        %v505 = vrsqrt.pop %v503
        %v506 = vmul.f32 %v505, %v503
        %v507 = vmul.f32 %v506, %v505
        %v508 = vmul.f32 0.5, %v507
        %v509 = vsub.f32 1.5, %v508
        %v510 = vmul.f32 %v505, %v509
        %vm511 = vweird.f32 %v503
        %vm512 = vweird.f32 %v505
        %vm513 = vmor %vm511, %vm512
        %v514 = vsel %vm513, %v505, %v510
        %v515 = vrsqrt.pop %v504
        %v516 = vmul.f32 %v515, %v504
        %v517 = vmul.f32 %v516, %v515
        %v518 = vmul.f32 0.5, %v517
        %v519 = vsub.f32 1.5, %v518
        %v520 = vmul.f32 %v515, %v519
        %vm521 = vweird.f32 %v504
        %vm522 = vweird.f32 %v515
        %vm523 = vmor %vm521, %vm522
        %v524 = vsel %vm523, %v515, %v520
        %v525 = vmul.f32 %v491, %v514
        %v526 = vmul.f32 %v492, %v524
        %v527 = vperm.slane %v370, 2
        %v528 = vmul.f32 %v525, %v527
        %v529 = vmul.f32 %v526, %v527
        %v530 = vperm.slane %v370, 3
        %v531 = vadd.f32 %v528, %v530
        %v532 = vadd.f32 %v529, %v530
        %v533 = vld [vmem:[#allocation9] sm:$0xff]
        %v534 = vld [vmem:[#allocation9 + $0x8] sm:$0xff]
        %v535 = vld [vmem:[#allocation9 + $0x10] sm:$0xff]
        %v536 = vld [vmem:[#allocation9 + $0x18] sm:$0xff]
        %v538 = vsel %vm377, %v531, 0
        %v541 = vsel %vm377, %v532, 0
        %543 = vmatpush.msra.mxu0 0.0
        %544 = vmatpush.msra.mxu0 0.0
        %545 = vmatpush.msra.mxu0 0.0
        %546 = vmatpush.msra.mxu0 0.0
        %547 = vmatpush.msra.mxu0 0.0
        %548 = vmatpush.msra.mxu0 0.0
        %549 = vmatpush.msra.mxu0 0.0
        %550 = vmatpush.msra.mxu0 0.0
        %551 = vmatpush.msra.mxu0 0.0
        %552 = vmatpush.msra.mxu0 0.0
        %553 = vmatpush.msra.mxu0 0.0
        %554 = vmatpush.msra.mxu0 0.0
        %555 = vmatpush.msra.mxu0 %v536
        %556 = vmatpush.msra.mxu0 %v535
        %557 = vmatpush.msra.mxu0 %v534
        %558 = vmatpush.msra.mxu0 %v533
        %559 = vmatmul.f32.gmra.mxu0 %v538
        %v560 = vpop.f32.mrf.mxu0
        %v561 = vadd.f32 0.0, %v560
        %562 = vmatmul.f32.gmra.mxu0 %v541
        %v563 = vpop.f32.mrf.mxu0
        %v564 = vadd.f32 0.0, %v563
        %565 = vdwg.mxu0
        %vm566 = vcmask 523264
        %567 = vst.msk [vmem:[#allocation2] sm:$0xff] %vm566, %v561
        %568 = vst.msk [vmem:[#allocation2 + $0x8] sm:$0xff] %vm566, %v564
        %v569 = vld [vmem:[#allocation11] sm:$0xff]
        %v570 = vld [vmem:[#allocation11 + $0x8] sm:$0xff]
        %v571 = vld [vmem:[#allocation11 + $0x10] sm:$0xff]
        %v572 = vld [vmem:[#allocation11 + $0x18] sm:$0xff]
        %v574 = vsel %vm377, %v479, 0
        %v577 = vsel %vm377, %v480, 0
        %v580 = vsel %vm377, %v481, 0
        %v583 = vsel %vm377, %v482, 0
        %585 = vmatpush.msra.mxu0 0.0
        %586 = vmatpush.msra.mxu0 0.0
        %587 = vmatpush.msra.mxu0 0.0
        %588 = vmatpush.msra.mxu0 0.0
        %589 = vmatpush.msra.mxu0 0.0
        %590 = vmatpush.msra.mxu0 0.0
        %591 = vmatpush.msra.mxu0 0.0
        %592 = vmatpush.msra.mxu0 0.0
        %593 = vmatpush.msra.mxu0 0.0
        %594 = vmatpush.msra.mxu0 0.0
        %595 = vmatpush.msra.mxu0 0.0
        %596 = vmatpush.msra.mxu0 0.0
        %597 = vmatpush.msra.mxu0 %v572
        %598 = vmatpush.msra.mxu0 %v571
        %599 = vmatpush.msra.mxu0 %v570
        %600 = vmatpush.msra.mxu0 %v569
        %601 = vmatmul.f32.gmra.mxu0 %v574
        %v602 = vpop.f32.mrf.mxu0
        %v603 = vadd.f32 0.0, %v602
        %604 = vmatmul.f32.gmra.mxu0 %v577
        %v605 = vpop.f32.mrf.mxu0
        %v606 = vadd.f32 0.0, %v605
        %607 = vmatmul.f32.gmra.mxu0 %v580
        %v608 = vpop.f32.mrf.mxu0
        %v609 = vadd.f32 0.0, %v608
        %610 = vmatmul.f32.gmra.mxu0 %v583
        %v611 = vpop.f32.mrf.mxu0
        %v612 = vadd.f32 0.0, %v611
        %613 = vdwg.mxu0
        %614 = vst.msk [vmem:[#allocation3] sm:$0xff] %vm566, %v603
        %615 = vst.msk [vmem:[#allocation3 + $0x8] sm:$0xff] %vm566, %v606
        %616 = vst.msk [vmem:[#allocation3 + $0x18] sm:$0xff] %vm566, %v609
        %617 = vst.msk [vmem:[#allocation3 + $0x20] sm:$0xff] %vm566, %v612
        %v618 = vld [vmem:[#allocation11] sm:$0xff]
        %v619 = vld [vmem:[#allocation11 + $0x8] sm:$0xff]
        %v620 = vld [vmem:[#allocation11 + $0x10] sm:$0xff]
        %v621 = vld [vmem:[#allocation11 + $0x18] sm:$0xff]
        %622 = vmatpush.msra.mxu0 0.0
        %623 = vmatpush.msra.mxu0 0.0
        %624 = vmatpush.msra.mxu0 0.0
        %625 = vmatpush.msra.mxu0 0.0
        %626 = vmatpush.msra.mxu0 0.0
        %627 = vmatpush.msra.mxu0 0.0
        %628 = vmatpush.msra.mxu0 0.0
        %629 = vmatpush.msra.mxu0 0.0
        %630 = vmatpush.msra.mxu0 0.0
        %631 = vmatpush.msra.mxu0 0.0
        %632 = vmatpush.msra.mxu0 0.0
        %633 = vmatpush.msra.mxu0 0.0
        %634 = vmatpush.msra.mxu0 %v621
        %635 = vmatpush.msra.mxu0 %v620
        %636 = vmatpush.msra.mxu0 %v619
        %637 = vmatpush.msra.mxu0 %v618
        %638 = vmatmul.f32.gmra.mxu0 %v538
        %v639 = vpop.f32.mrf.mxu0
        %v640 = vadd.f32 0.0, %v639
        %641 = vmatmul.f32.gmra.mxu0 %v541
        %v642 = vpop.f32.mrf.mxu0
        %v643 = vadd.f32 0.0, %v642
        %644 = vdwg.mxu0
        %645 = vst.msk [vmem:[#allocation3 + $0x10] sm:$0xff] %vm566, %v640
        %646 = vst.msk [vmem:[#allocation3 + $0x28] sm:$0xff] %vm566, %v643
        %v647 = vld [vmem:[#allocation12] sm:$0xff]
        %v648 = vld [vmem:[#allocation12 + $0x8] sm:$0xff]
        %v649 = vld [vmem:[#allocation12 + $0x10] sm:$0xff]
        %v650 = vld [vmem:[#allocation12 + $0x18] sm:$0xff]
        %651 = vmatpush.msra.mxu0 0.0
        %652 = vmatpush.msra.mxu0 0.0
        %653 = vmatpush.msra.mxu0 0.0
        %654 = vmatpush.msra.mxu0 0.0
        %655 = vmatpush.msra.mxu0 0.0
        %656 = vmatpush.msra.mxu0 0.0
        %657 = vmatpush.msra.mxu0 0.0
        %658 = vmatpush.msra.mxu0 0.0
        %659 = vmatpush.msra.mxu0 0.0
        %660 = vmatpush.msra.mxu0 0.0
        %661 = vmatpush.msra.mxu0 0.0
        %662 = vmatpush.msra.mxu0 0.0
        %663 = vmatpush.msra.mxu0 %v650
        %664 = vmatpush.msra.mxu0 %v649
        %665 = vmatpush.msra.mxu0 %v648
        %666 = vmatpush.msra.mxu0 %v647
        %667 = vmatmul.f32.gmra.mxu0 %v574
        %v668 = vpop.f32.mrf.mxu0
        %v669 = vadd.f32 0.0, %v668
        %670 = vmatmul.f32.gmra.mxu0 %v577
        %v671 = vpop.f32.mrf.mxu0
        %v672 = vadd.f32 0.0, %v671
        %673 = vmatmul.f32.gmra.mxu0 %v580
        %v674 = vpop.f32.mrf.mxu0
        %v675 = vadd.f32 0.0, %v674
        %676 = vmatmul.f32.gmra.mxu0 %v583
        %v677 = vpop.f32.mrf.mxu0
        %v678 = vadd.f32 0.0, %v677
        %679 = vdwg.mxu0
        %680 = vst.msk [vmem:[#allocation4] sm:$0xff] %vm566, %v669
        %681 = vst.msk [vmem:[#allocation4 + $0x8] sm:$0xff] %vm566, %v672
        %682 = vst.msk [vmem:[#allocation4 + $0x18] sm:$0xff] %vm566, %v675
        %683 = vst.msk [vmem:[#allocation4 + $0x20] sm:$0xff] %vm566, %v678
        %v684 = vld [vmem:[#allocation12] sm:$0xff]
        %v685 = vld [vmem:[#allocation12 + $0x8] sm:$0xff]
        %v686 = vld [vmem:[#allocation12 + $0x10] sm:$0xff]
        %v687 = vld [vmem:[#allocation12 + $0x18] sm:$0xff]
        %688 = vmatpush.msra.mxu0 0.0
        %689 = vmatpush.msra.mxu0 0.0
        %690 = vmatpush.msra.mxu0 0.0
        %691 = vmatpush.msra.mxu0 0.0
        %692 = vmatpush.msra.mxu0 0.0
        %693 = vmatpush.msra.mxu0 0.0
        %694 = vmatpush.msra.mxu0 0.0
        %695 = vmatpush.msra.mxu0 0.0
        %696 = vmatpush.msra.mxu0 0.0
        %697 = vmatpush.msra.mxu0 0.0
        %698 = vmatpush.msra.mxu0 0.0
        %699 = vmatpush.msra.mxu0 0.0
        %700 = vmatpush.msra.mxu0 %v687
        %701 = vmatpush.msra.mxu0 %v686
        %702 = vmatpush.msra.mxu0 %v685
        %703 = vmatpush.msra.mxu0 %v684
        %704 = vmatmul.f32.gmra.mxu0 %v538
        %v705 = vpop.f32.mrf.mxu0
        %v706 = vadd.f32 0.0, %v705
        %707 = vmatmul.f32.gmra.mxu0 %v541
        %v708 = vpop.f32.mrf.mxu0
        %v709 = vadd.f32 0.0, %v708
        %710 = vdwg.mxu0
        %711 = vst.msk [vmem:[#allocation4 + $0x10] sm:$0xff] %vm566, %v706
        %712 = vst.msk [vmem:[#allocation4 + $0x28] sm:$0xff] %vm566, %v709
        %v713 = vld [vmem:[#allocation2] sm:$0xff]
        %v714 = vld [vmem:[#allocation2 + $0x8] sm:$0xff]
        %v715 = vld [vmem:[#allocation3] sm:$0xff]
        %v716 = vld [vmem:[#allocation3 + $0x8] sm:$0xff]
        %v717 = vld [vmem:[#allocation3 + $0x10] sm:$0xff]
        %v718 = vld [vmem:[#allocation3 + $0x18] sm:$0xff]
        %v719 = vld [vmem:[#allocation3 + $0x20] sm:$0xff]
        %v720 = vld [vmem:[#allocation3 + $0x28] sm:$0xff]
        %v721 = vld [vmem:[#allocation4] sm:$0xff]
        %v722 = vld [vmem:[#allocation4 + $0x8] sm:$0xff]
        %v723 = vld [vmem:[#allocation4 + $0x10] sm:$0xff]
        %v724 = vld [vmem:[#allocation4 + $0x18] sm:$0xff]
        %v725 = vld [vmem:[#allocation4 + $0x20] sm:$0xff]
        %v726 = vld [vmem:[#allocation4 + $0x28] sm:$0xff]
        %vm727 = vcmask 130048
        %v729 = vsel %vm727, %v713, 0
        %v732 = vsel %vm727, %v715, 0
        %v735 = vsel %vm727, %v716, 0
        %v738 = vsel %vm727, %v717, 0
        %740 = vmatpush.xpose.msra.mxu0 0.0
        %741 = vmatpush.xpose.msra.mxu0 0.0
        %742 = vmatpush.xpose.msra.mxu0 0.0
        %743 = vmatpush.xpose.msra.mxu0 0.0
        %744 = vmatpush.xpose.msra.mxu0 0.0
        %745 = vmatpush.xpose.msra.mxu0 0.0
        %746 = vmatpush.xpose.msra.mxu0 0.0
        %747 = vmatpush.xpose.msra.mxu0 0.0
        %748 = vmatpush.xpose.msra.mxu0 0.0
        %749 = vmatpush.xpose.msra.mxu0 0.0
        %750 = vmatpush.xpose.msra.mxu0 0.0
        %751 = vmatpush.xpose.msra.mxu0 0.0
        %752 = vmatpush.xpose.msra.mxu0 0.0
        %753 = vmatpush.xpose.msra.mxu0 %v738
        %754 = vmatpush.xpose.msra.mxu0 %v735
        %755 = vmatpush.xpose.msra.mxu0 %v732
        %756 = vmatmul.f32.gmra.mxu0 %v729
        %v757 = vpop.f32.mrf.mxu0
        %v758 = vadd.f32 0.0, %v757
        %759 = vdwg.mxu0
        %v761 = vsel %vm727, %v714, 0
        %v764 = vsel %vm727, %v718, 0
        %v767 = vsel %vm727, %v719, 0
        %v770 = vsel %vm727, %v720, 0
        %772 = vmatpush.xpose.msra.mxu0 0.0
        %773 = vmatpush.xpose.msra.mxu0 0.0
        %774 = vmatpush.xpose.msra.mxu0 0.0
        %775 = vmatpush.xpose.msra.mxu0 0.0
        %776 = vmatpush.xpose.msra.mxu0 0.0
        %777 = vmatpush.xpose.msra.mxu0 0.0
        %778 = vmatpush.xpose.msra.mxu0 0.0
        %779 = vmatpush.xpose.msra.mxu0 0.0
        %780 = vmatpush.xpose.msra.mxu0 0.0
        %781 = vmatpush.xpose.msra.mxu0 0.0
        %782 = vmatpush.xpose.msra.mxu0 0.0
        %783 = vmatpush.xpose.msra.mxu0 0.0
        %784 = vmatpush.xpose.msra.mxu0 0.0
        %785 = vmatpush.xpose.msra.mxu0 %v770
        %786 = vmatpush.xpose.msra.mxu0 %v767
        %787 = vmatpush.xpose.msra.mxu0 %v764
        %788 = vmatmul.f32.gmra.mxu0 %v761
        %v789 = vpop.f32.mrf.mxu0
        %v790 = vadd.f32 0.0, %v789
        %791 = vdwg.mxu0
        %vm792 = vcmask 195584
        %v793 = vsel %vm792, %v758, -inf
        %794 = vmax.xlane.f32.xlu0 %v793
        %v795 = vpop.xlane.xlu0 %794
        %v796 = vsel %vm792, %v790, -inf
        %797 = vmax.xlane.f32.xlu0 %v796
        %v798 = vpop.xlane.xlu0 %797
        %v799 = vsub.f32 %v758, %v795
        %v800 = vsub.f32 %v790, %v798
        %v801 = vmul.f32 %v799, 1.442695
        %v802 = vpow.pop %v801
        %v803 = vmul.f32 %v800, 1.442695
        %v804 = vpow.pop %v803
        %v805 = vsel %vm792, %v802, 0.0
        %806 = vadd.xlane.f32.xlu0 %v805
        %v807 = vpop.xlane.xlu0 %806
        %v808 = vsel %vm792, %v804, 0.0
        %809 = vadd.xlane.f32.xlu0 %v808
        %v810 = vpop.xlane.xlu0 %809
        %v811 = vrcp.pop %v807
        %v812 = vmul.f32 %v807, %v811
        %v813 = vsub.f32 1.0, %v812
        %v814 = vmul.f32 %v811, %v813
        %v815 = vadd.f32 %v811, %v814
        %vm816 = vweird.f32 %v807
        %vm817 = vweird.f32 %v811
        %vm818 = vmor %vm816, %vm817
        %v819 = vsel %vm818, %v811, %v815
        %v820 = vand.u32 2147483647, %v807
        %vm821 = vcmp.eq.f32.partialorder %v820, 8.507059e+37
        %v822 = vand.u32 %v807, 2147483648
        %v823 = vor.u32 1.1754944e-38, %v822
        %v824 = vsel %vm821, %v823, %v819
        %v825 = vrcp.pop %v810
        %v826 = vmul.f32 %v810, %v825
        %v827 = vsub.f32 1.0, %v826
        %v828 = vmul.f32 %v825, %v827
        %v829 = vadd.f32 %v825, %v828
        %vm830 = vweird.f32 %v810
        %vm831 = vweird.f32 %v825
        %vm832 = vmor %vm830, %vm831
        %v833 = vsel %vm832, %v825, %v829
        %v834 = vand.u32 2147483647, %v810
        %vm835 = vcmp.eq.f32.partialorder %v834, 8.507059e+37
        %v836 = vand.u32 %v810, 2147483648
        %v837 = vor.u32 1.1754944e-38, %v836
        %v838 = vsel %vm835, %v837, %v833
        %v839 = vmul.f32 %v802, %v824
        %v840 = vmul.f32 %v804, %v838
        %v842 = vsel %vm792, %v839, 0
        %844 = vmatpush.msra.mxu0 0.0
        %845 = vmatpush.msra.mxu0 0.0
        %846 = vmatpush.msra.mxu0 0.0
        %847 = vmatpush.msra.mxu0 0.0
        %848 = vmatpush.msra.mxu0 0.0
        %849 = vmatpush.msra.mxu0 0.0
        %850 = vmatpush.msra.mxu0 0.0
        %851 = vmatpush.msra.mxu0 0.0
        %852 = vmatpush.msra.mxu0 0.0
        %853 = vmatpush.msra.mxu0 0.0
        %854 = vmatpush.msra.mxu0 0.0
        %855 = vmatpush.msra.mxu0 0.0
        %856 = vmatpush.msra.mxu0 0.0
        %857 = vmatpush.msra.mxu0 %v723
        %858 = vmatpush.msra.mxu0 %v722
        %859 = vmatpush.msra.mxu0 %v721
        %860 = vmatmul.f32.gmra.mxu0 %v842
        %v861 = vpop.f32.mrf.mxu0
        %v862 = vadd.f32 0.0, %v861
        %863 = vdwg.mxu0
        %v865 = vsel %vm792, %v840, 0
        %867 = vmatpush.msra.mxu0 0.0
        %868 = vmatpush.msra.mxu0 0.0
        %869 = vmatpush.msra.mxu0 0.0
        %870 = vmatpush.msra.mxu0 0.0
        %871 = vmatpush.msra.mxu0 0.0
        %872 = vmatpush.msra.mxu0 0.0
        %873 = vmatpush.msra.mxu0 0.0
        %874 = vmatpush.msra.mxu0 0.0
        %875 = vmatpush.msra.mxu0 0.0
        %876 = vmatpush.msra.mxu0 0.0
        %877 = vmatpush.msra.mxu0 0.0
        %878 = vmatpush.msra.mxu0 0.0
        %879 = vmatpush.msra.mxu0 0.0
        %880 = vmatpush.msra.mxu0 %v726
        %881 = vmatpush.msra.mxu0 %v725
        %882 = vmatpush.msra.mxu0 %v724
        %883 = vmatmul.f32.gmra.mxu0 %v865
        %v884 = vpop.f32.mrf.mxu0
        %v885 = vadd.f32 0.0, %v884
        %886 = vdwg.mxu0
        %887 = vst.msk [vmem:[#allocation5] sm:$0xff] %vm727, %v862
        %888 = vst.msk [vmem:[#allocation5 + $0x8] sm:$0xff] %vm727, %v885
        %v889 = vld [vmem:[#allocation2] sm:$0xff]
        %v890 = vld [vmem:[#allocation2 + $0x8] sm:$0xff]
        %v891 = vld [vmem:[#allocation3] sm:$0xff]
        %v892 = vld [vmem:[#allocation3 + $0x8] sm:$0xff]
        %v893 = vld [vmem:[#allocation3 + $0x10] sm:$0xff]
        %v894 = vld [vmem:[#allocation3 + $0x18] sm:$0xff]
        %v895 = vld [vmem:[#allocation3 + $0x20] sm:$0xff]
        %v896 = vld [vmem:[#allocation3 + $0x28] sm:$0xff]
        %v897 = vld [vmem:[#allocation4] sm:$0xff]
        %v898 = vld [vmem:[#allocation4 + $0x8] sm:$0xff]
        %v899 = vld [vmem:[#allocation4 + $0x10] sm:$0xff]
        %v900 = vld [vmem:[#allocation4 + $0x18] sm:$0xff]
        %v901 = vld [vmem:[#allocation4 + $0x20] sm:$0xff]
        %v902 = vld [vmem:[#allocation4 + $0x28] sm:$0xff]
        %904 = vrot.lane.b32.xlu0 %v889, 112
        %v905 = vpop.permute.xlu0 %904
        %909 = vrot.lane.b32.xlu0 %v891, 112
        %v910 = vpop.permute.xlu0 %909
        %911 = vrot.lane.b32.xlu0 %v892, 112
        %v912 = vpop.permute.xlu0 %911
        %913 = vrot.lane.b32.xlu0 %v893, 112
        %v914 = vpop.permute.xlu0 %913
        %v915 = vsel %vm727, %v905, 0
        %v917 = vsel %vm727, %v910, 0
        %v919 = vsel %vm727, %v912, 0
        %v921 = vsel %vm727, %v914, 0
        %923 = vmatpush.xpose.msra.mxu0 0.0
        %924 = vmatpush.xpose.msra.mxu0 0.0
        %925 = vmatpush.xpose.msra.mxu0 0.0
        %926 = vmatpush.xpose.msra.mxu0 0.0
        %927 = vmatpush.xpose.msra.mxu0 0.0
        %928 = vmatpush.xpose.msra.mxu0 0.0
        %929 = vmatpush.xpose.msra.mxu0 0.0
        %930 = vmatpush.xpose.msra.mxu0 0.0
        %931 = vmatpush.xpose.msra.mxu0 0.0
        %932 = vmatpush.xpose.msra.mxu0 0.0
        %933 = vmatpush.xpose.msra.mxu0 0.0
        %934 = vmatpush.xpose.msra.mxu0 0.0
        %935 = vmatpush.xpose.msra.mxu0 0.0
        %936 = vmatpush.xpose.msra.mxu0 %v921
        %937 = vmatpush.xpose.msra.mxu0 %v919
        %938 = vmatpush.xpose.msra.mxu0 %v917
        %939 = vmatmul.f32.gmra.mxu0 %v915
        %v940 = vpop.f32.mrf.mxu0
        %v941 = vadd.f32 0.0, %v940
        %942 = vdwg.mxu0
        %944 = vrot.lane.b32.xlu0 %v890, 112
        %v945 = vpop.permute.xlu0 %944
        %949 = vrot.lane.b32.xlu0 %v894, 112
        %v950 = vpop.permute.xlu0 %949
        %951 = vrot.lane.b32.xlu0 %v895, 112
        %v952 = vpop.permute.xlu0 %951
        %953 = vrot.lane.b32.xlu0 %v896, 112
        %v954 = vpop.permute.xlu0 %953
        %v955 = vsel %vm727, %v945, 0
        %v957 = vsel %vm727, %v950, 0
        %v959 = vsel %vm727, %v952, 0
        %v961 = vsel %vm727, %v954, 0
        %963 = vmatpush.xpose.msra.mxu0 0.0
        %964 = vmatpush.xpose.msra.mxu0 0.0
        %965 = vmatpush.xpose.msra.mxu0 0.0
        %966 = vmatpush.xpose.msra.mxu0 0.0
        %967 = vmatpush.xpose.msra.mxu0 0.0
        %968 = vmatpush.xpose.msra.mxu0 0.0
        %969 = vmatpush.xpose.msra.mxu0 0.0
        %970 = vmatpush.xpose.msra.mxu0 0.0
        %971 = vmatpush.xpose.msra.mxu0 0.0
        %972 = vmatpush.xpose.msra.mxu0 0.0
        %973 = vmatpush.xpose.msra.mxu0 0.0
        %974 = vmatpush.xpose.msra.mxu0 0.0
        %975 = vmatpush.xpose.msra.mxu0 0.0
        %976 = vmatpush.xpose.msra.mxu0 %v961
        %977 = vmatpush.xpose.msra.mxu0 %v959
        %978 = vmatpush.xpose.msra.mxu0 %v957
        %979 = vmatmul.f32.gmra.mxu0 %v955
        %v980 = vpop.f32.mrf.mxu0
        %v981 = vadd.f32 0.0, %v980
        %982 = vdwg.mxu0
        %v983 = vsel %vm792, %v941, -inf
        %984 = vmax.xlane.f32.xlu0 %v983
        %v985 = vpop.xlane.xlu0 %984
        %v986 = vsel %vm792, %v981, -inf
        %987 = vmax.xlane.f32.xlu0 %v986
        %v988 = vpop.xlane.xlu0 %987
        %v989 = vsub.f32 %v941, %v985
        %v990 = vsub.f32 %v981, %v988
        %v991 = vmul.f32 %v989, 1.442695
        %v992 = vpow.pop %v991
        %v993 = vmul.f32 %v990, 1.442695
        %v994 = vpow.pop %v993
        %v995 = vsel %vm792, %v992, 0.0
        %996 = vadd.xlane.f32.xlu0 %v995
        %v997 = vpop.xlane.xlu0 %996
        %v998 = vsel %vm792, %v994, 0.0
        %999 = vadd.xlane.f32.xlu0 %v998
        %v1000 = vpop.xlane.xlu0 %999
        %v1001 = vrcp.pop %v997
        %v1002 = vmul.f32 %v997, %v1001
        %v1003 = vsub.f32 1.0, %v1002
        %v1004 = vmul.f32 %v1001, %v1003
        %v1005 = vadd.f32 %v1001, %v1004
        %vm1006 = vweird.f32 %v997
        %vm1007 = vweird.f32 %v1001
        %vm1008 = vmor %vm1006, %vm1007
        %v1009 = vsel %vm1008, %v1001, %v1005
        %v1010 = vand.u32 2147483647, %v997
        %vm1011 = vcmp.eq.f32.partialorder %v1010, 8.507059e+37
        %v1012 = vand.u32 %v997, 2147483648
        %v1013 = vor.u32 1.1754944e-38, %v1012
        %v1014 = vsel %vm1011, %v1013, %v1009
        %v1015 = vrcp.pop %v1000
        %v1016 = vmul.f32 %v1000, %v1015
        %v1017 = vsub.f32 1.0, %v1016
        %v1018 = vmul.f32 %v1015, %v1017
        %v1019 = vadd.f32 %v1015, %v1018
        %vm1020 = vweird.f32 %v1000
        %vm1021 = vweird.f32 %v1015
        %vm1022 = vmor %vm1020, %vm1021
        %v1023 = vsel %vm1022, %v1015, %v1019
        %v1024 = vand.u32 2147483647, %v1000
        %vm1025 = vcmp.eq.f32.partialorder %v1024, 8.507059e+37
        %v1026 = vand.u32 %v1000, 2147483648
        %v1027 = vor.u32 1.1754944e-38, %v1026
        %v1028 = vsel %vm1025, %v1027, %v1023
        %v1029 = vmul.f32 %v992, %v1014
        %v1030 = vmul.f32 %v994, %v1028
        %1034 = vrot.lane.b32.xlu0 %v897, 112
        %v1035 = vpop.permute.xlu0 %1034
        %1036 = vrot.lane.b32.xlu0 %v898, 112
        %v1037 = vpop.permute.xlu0 %1036
        %1038 = vrot.lane.b32.xlu0 %v899, 112
        %v1039 = vpop.permute.xlu0 %1038
        %v1044 = vsel %vm792, %v1029, 0
        %1046 = vmatpush.msra.mxu0 0.0
        %1047 = vmatpush.msra.mxu0 0.0
        %1048 = vmatpush.msra.mxu0 0.0
        %1049 = vmatpush.msra.mxu0 0.0
        %1050 = vmatpush.msra.mxu0 0.0
        %1051 = vmatpush.msra.mxu0 0.0
        %1052 = vmatpush.msra.mxu0 0.0
        %1053 = vmatpush.msra.mxu0 0.0
        %1054 = vmatpush.msra.mxu0 0.0
        %1055 = vmatpush.msra.mxu0 0.0
        %1056 = vmatpush.msra.mxu0 0.0
        %1057 = vmatpush.msra.mxu0 0.0
        %1058 = vmatpush.msra.mxu0 0.0
        %1059 = vmatpush.msra.mxu0 %v1039
        %1060 = vmatpush.msra.mxu0 %v1037
        %1061 = vmatpush.msra.mxu0 %v1035
        %1062 = vmatmul.f32.gmra.mxu0 %v1044
        %v1063 = vpop.f32.mrf.mxu0
        %v1064 = vadd.f32 0.0, %v1063
        %1065 = vdwg.mxu0
        %1069 = vrot.lane.b32.xlu0 %v900, 112
        %v1070 = vpop.permute.xlu0 %1069
        %1071 = vrot.lane.b32.xlu0 %v901, 112
        %v1072 = vpop.permute.xlu0 %1071
        %1073 = vrot.lane.b32.xlu0 %v902, 112
        %v1074 = vpop.permute.xlu0 %1073
        %v1079 = vsel %vm792, %v1030, 0
        %1081 = vmatpush.msra.mxu0 0.0
        %1082 = vmatpush.msra.mxu0 0.0
        %1083 = vmatpush.msra.mxu0 0.0
        %1084 = vmatpush.msra.mxu0 0.0
        %1085 = vmatpush.msra.mxu0 0.0
        %1086 = vmatpush.msra.mxu0 0.0
        %1087 = vmatpush.msra.mxu0 0.0
        %1088 = vmatpush.msra.mxu0 0.0
        %1089 = vmatpush.msra.mxu0 0.0
        %1090 = vmatpush.msra.mxu0 0.0
        %1091 = vmatpush.msra.mxu0 0.0
        %1092 = vmatpush.msra.mxu0 0.0
        %1093 = vmatpush.msra.mxu0 0.0
        %1094 = vmatpush.msra.mxu0 %v1074
        %1095 = vmatpush.msra.mxu0 %v1072
        %1096 = vmatpush.msra.mxu0 %v1070
        %1097 = vmatmul.f32.gmra.mxu0 %v1079
        %v1098 = vpop.f32.mrf.mxu0
        %v1099 = vadd.f32 0.0, %v1098
        %1100 = vdwg.mxu0
        %1103 = vrot.lane.b32.xlu0 %v1064, 16
        %v1104 = vpop.permute.xlu0 %1103
        %1105 = vrot.lane.b32.xlu0 %v1099, 16
        %v1106 = vpop.permute.xlu0 %1105
        %vm1109 = vcmask 261248
        %1110 = vst.msk [vmem:[#allocation5] sm:$0xff] %vm1109, %v1104
        %1111 = vst.msk [vmem:[#allocation5 + $0x8] sm:$0xff] %vm1109, %v1106
        %v1112 = vld [vmem:[#allocation2] sm:$0xff]
        %v1113 = vld [vmem:[#allocation2 + $0x8] sm:$0xff]
        %v1114 = vld [vmem:[#allocation3] sm:$0xff]
        %v1115 = vld [vmem:[#allocation3 + $0x8] sm:$0xff]
        %v1116 = vld [vmem:[#allocation3 + $0x10] sm:$0xff]
        %v1117 = vld [vmem:[#allocation3 + $0x18] sm:$0xff]
        %v1118 = vld [vmem:[#allocation3 + $0x20] sm:$0xff]
        %v1119 = vld [vmem:[#allocation3 + $0x28] sm:$0xff]
        %v1120 = vld [vmem:[#allocation4] sm:$0xff]
        %v1121 = vld [vmem:[#allocation4 + $0x8] sm:$0xff]
        %v1122 = vld [vmem:[#allocation4 + $0x10] sm:$0xff]
        %v1123 = vld [vmem:[#allocation4 + $0x18] sm:$0xff]
        %v1124 = vld [vmem:[#allocation4 + $0x20] sm:$0xff]
        %v1125 = vld [vmem:[#allocation4 + $0x28] sm:$0xff]
        %1127 = vrot.lane.b32.xlu0 %v1112, 96
        %v1128 = vpop.permute.xlu0 %1127
        %1132 = vrot.lane.b32.xlu0 %v1114, 96
        %v1133 = vpop.permute.xlu0 %1132
        %1134 = vrot.lane.b32.xlu0 %v1115, 96
        %v1135 = vpop.permute.xlu0 %1134
        %1136 = vrot.lane.b32.xlu0 %v1116, 96
        %v1137 = vpop.permute.xlu0 %1136
        %v1138 = vsel %vm727, %v1128, 0
        %v1140 = vsel %vm727, %v1133, 0
        %v1142 = vsel %vm727, %v1135, 0
        %v1144 = vsel %vm727, %v1137, 0
        %1146 = vmatpush.xpose.msra.mxu0 0.0
        %1147 = vmatpush.xpose.msra.mxu0 0.0
        %1148 = vmatpush.xpose.msra.mxu0 0.0
        %1149 = vmatpush.xpose.msra.mxu0 0.0
        %1150 = vmatpush.xpose.msra.mxu0 0.0
        %1151 = vmatpush.xpose.msra.mxu0 0.0
        %1152 = vmatpush.xpose.msra.mxu0 0.0
        %1153 = vmatpush.xpose.msra.mxu0 0.0
        %1154 = vmatpush.xpose.msra.mxu0 0.0
        %1155 = vmatpush.xpose.msra.mxu0 0.0
        %1156 = vmatpush.xpose.msra.mxu0 0.0
        %1157 = vmatpush.xpose.msra.mxu0 0.0
        %1158 = vmatpush.xpose.msra.mxu0 0.0
        %1159 = vmatpush.xpose.msra.mxu0 %v1144
        %1160 = vmatpush.xpose.msra.mxu0 %v1142
        %1161 = vmatpush.xpose.msra.mxu0 %v1140
        %1162 = vmatmul.f32.gmra.mxu0 %v1138
        %v1163 = vpop.f32.mrf.mxu0
        %v1164 = vadd.f32 0.0, %v1163
        %1165 = vdwg.mxu0
        %1167 = vrot.lane.b32.xlu0 %v1113, 96
        %v1168 = vpop.permute.xlu0 %1167
        %1172 = vrot.lane.b32.xlu0 %v1117, 96
        %v1173 = vpop.permute.xlu0 %1172
        %1174 = vrot.lane.b32.xlu0 %v1118, 96
        %v1175 = vpop.permute.xlu0 %1174
        %1176 = vrot.lane.b32.xlu0 %v1119, 96
        %v1177 = vpop.permute.xlu0 %1176
        %v1178 = vsel %vm727, %v1168, 0
        %v1180 = vsel %vm727, %v1173, 0
        %v1182 = vsel %vm727, %v1175, 0
        %v1184 = vsel %vm727, %v1177, 0
        %1186 = vmatpush.xpose.msra.mxu0 0.0
        %1187 = vmatpush.xpose.msra.mxu0 0.0
        %1188 = vmatpush.xpose.msra.mxu0 0.0
        %1189 = vmatpush.xpose.msra.mxu0 0.0
        %1190 = vmatpush.xpose.msra.mxu0 0.0
        %1191 = vmatpush.xpose.msra.mxu0 0.0
        %1192 = vmatpush.xpose.msra.mxu0 0.0
        %1193 = vmatpush.xpose.msra.mxu0 0.0
        %1194 = vmatpush.xpose.msra.mxu0 0.0
        %1195 = vmatpush.xpose.msra.mxu0 0.0
        %1196 = vmatpush.xpose.msra.mxu0 0.0
        %1197 = vmatpush.xpose.msra.mxu0 0.0
        %1198 = vmatpush.xpose.msra.mxu0 0.0
        %1199 = vmatpush.xpose.msra.mxu0 %v1184
        %1200 = vmatpush.xpose.msra.mxu0 %v1182
        %1201 = vmatpush.xpose.msra.mxu0 %v1180
        %1202 = vmatmul.f32.gmra.mxu0 %v1178
        %v1203 = vpop.f32.mrf.mxu0
        %v1204 = vadd.f32 0.0, %v1203
        %1205 = vdwg.mxu0
        %v1206 = vsel %vm792, %v1164, -inf
        %1207 = vmax.xlane.f32.xlu0 %v1206
        %v1208 = vpop.xlane.xlu0 %1207
        %v1209 = vsel %vm792, %v1204, -inf
        %1210 = vmax.xlane.f32.xlu0 %v1209
        %v1211 = vpop.xlane.xlu0 %1210
        %v1212 = vsub.f32 %v1164, %v1208
        %v1213 = vsub.f32 %v1204, %v1211
        %v1214 = vmul.f32 %v1212, 1.442695
        %v1215 = vpow.pop %v1214
        %v1216 = vmul.f32 %v1213, 1.442695
        %v1217 = vpow.pop %v1216
        %v1218 = vsel %vm792, %v1215, 0.0
        %1219 = vadd.xlane.f32.xlu0 %v1218
        %v1220 = vpop.xlane.xlu0 %1219
        %v1221 = vsel %vm792, %v1217, 0.0
        %1222 = vadd.xlane.f32.xlu0 %v1221
        %v1223 = vpop.xlane.xlu0 %1222
        %v1224 = vrcp.pop %v1220
        %v1225 = vmul.f32 %v1220, %v1224
        %v1226 = vsub.f32 1.0, %v1225
        %v1227 = vmul.f32 %v1224, %v1226
        %v1228 = vadd.f32 %v1224, %v1227
        %vm1229 = vweird.f32 %v1220
        %vm1230 = vweird.f32 %v1224
        %vm1231 = vmor %vm1229, %vm1230
        %v1232 = vsel %vm1231, %v1224, %v1228
        %v1233 = vand.u32 2147483647, %v1220
        %vm1234 = vcmp.eq.f32.partialorder %v1233, 8.507059e+37
        %v1235 = vand.u32 %v1220, 2147483648
        %v1236 = vor.u32 1.1754944e-38, %v1235
        %v1237 = vsel %vm1234, %v1236, %v1232
        %v1238 = vrcp.pop %v1223
        %v1239 = vmul.f32 %v1223, %v1238
        %v1240 = vsub.f32 1.0, %v1239
        %v1241 = vmul.f32 %v1238, %v1240
        %v1242 = vadd.f32 %v1238, %v1241
        %vm1243 = vweird.f32 %v1223
        %vm1244 = vweird.f32 %v1238
        %vm1245 = vmor %vm1243, %vm1244
        %v1246 = vsel %vm1245, %v1238, %v1242
        %v1247 = vand.u32 2147483647, %v1223
        %vm1248 = vcmp.eq.f32.partialorder %v1247, 8.507059e+37
        %v1249 = vand.u32 %v1223, 2147483648
        %v1250 = vor.u32 1.1754944e-38, %v1249
        %v1251 = vsel %vm1248, %v1250, %v1246
        %v1252 = vmul.f32 %v1215, %v1237
        %v1253 = vmul.f32 %v1217, %v1251
        %1257 = vrot.lane.b32.xlu0 %v1120, 96
        %v1258 = vpop.permute.xlu0 %1257
        %1259 = vrot.lane.b32.xlu0 %v1121, 96
        %v1260 = vpop.permute.xlu0 %1259
        %1261 = vrot.lane.b32.xlu0 %v1122, 96
        %v1262 = vpop.permute.xlu0 %1261
        %v1267 = vsel %vm792, %v1252, 0
        %1269 = vmatpush.msra.mxu0 0.0
        %1270 = vmatpush.msra.mxu0 0.0
        %1271 = vmatpush.msra.mxu0 0.0
        %1272 = vmatpush.msra.mxu0 0.0
        %1273 = vmatpush.msra.mxu0 0.0
        %1274 = vmatpush.msra.mxu0 0.0
        %1275 = vmatpush.msra.mxu0 0.0
        %1276 = vmatpush.msra.mxu0 0.0
        %1277 = vmatpush.msra.mxu0 0.0
        %1278 = vmatpush.msra.mxu0 0.0
        %1279 = vmatpush.msra.mxu0 0.0
        %1280 = vmatpush.msra.mxu0 0.0
        %1281 = vmatpush.msra.mxu0 0.0
        %1282 = vmatpush.msra.mxu0 %v1262
        %1283 = vmatpush.msra.mxu0 %v1260
        %1284 = vmatpush.msra.mxu0 %v1258
        %1285 = vmatmul.f32.gmra.mxu0 %v1267
        %v1286 = vpop.f32.mrf.mxu0
        %v1287 = vadd.f32 0.0, %v1286
        %1288 = vdwg.mxu0
        %1292 = vrot.lane.b32.xlu0 %v1123, 96
        %v1293 = vpop.permute.xlu0 %1292
        %1294 = vrot.lane.b32.xlu0 %v1124, 96
        %v1295 = vpop.permute.xlu0 %1294
        %1296 = vrot.lane.b32.xlu0 %v1125, 96
        %v1297 = vpop.permute.xlu0 %1296
        %v1302 = vsel %vm792, %v1253, 0
        %1304 = vmatpush.msra.mxu0 0.0
        %1305 = vmatpush.msra.mxu0 0.0
        %1306 = vmatpush.msra.mxu0 0.0
        %1307 = vmatpush.msra.mxu0 0.0
        %1308 = vmatpush.msra.mxu0 0.0
        %1309 = vmatpush.msra.mxu0 0.0
        %1310 = vmatpush.msra.mxu0 0.0
        %1311 = vmatpush.msra.mxu0 0.0
        %1312 = vmatpush.msra.mxu0 0.0
        %1313 = vmatpush.msra.mxu0 0.0
        %1314 = vmatpush.msra.mxu0 0.0
        %1315 = vmatpush.msra.mxu0 0.0
        %1316 = vmatpush.msra.mxu0 0.0
        %1317 = vmatpush.msra.mxu0 %v1297
        %1318 = vmatpush.msra.mxu0 %v1295
        %1319 = vmatpush.msra.mxu0 %v1293
        %1320 = vmatmul.f32.gmra.mxu0 %v1302
        %v1321 = vpop.f32.mrf.mxu0
        %v1322 = vadd.f32 0.0, %v1321
        %1323 = vdwg.mxu0
        %1326 = vrot.lane.b32.xlu0 %v1287, 32
        %v1327 = vpop.permute.xlu0 %1326
        %1328 = vrot.lane.b32.xlu0 %v1322, 32
        %v1329 = vpop.permute.xlu0 %1328
        %vm1332 = vcmask 392448
        %1333 = vst.msk [vmem:[#allocation5] sm:$0xff] %vm1332, %v1327
        %1334 = vst.msk [vmem:[#allocation5 + $0x8] sm:$0xff] %vm1332, %v1329
        %v1335 = vld [vmem:[#allocation2] sm:$0xff]
        %v1336 = vld [vmem:[#allocation2 + $0x8] sm:$0xff]
        %v1337 = vld [vmem:[#allocation3] sm:$0xff]
        %v1338 = vld [vmem:[#allocation3 + $0x8] sm:$0xff]
        %v1339 = vld [vmem:[#allocation3 + $0x10] sm:$0xff]
        %v1340 = vld [vmem:[#allocation3 + $0x18] sm:$0xff]
        %v1341 = vld [vmem:[#allocation3 + $0x20] sm:$0xff]
        %v1342 = vld [vmem:[#allocation3 + $0x28] sm:$0xff]
        %v1343 = vld [vmem:[#allocation4] sm:$0xff]
        %v1344 = vld [vmem:[#allocation4 + $0x8] sm:$0xff]
        %v1345 = vld [vmem:[#allocation4 + $0x10] sm:$0xff]
        %v1346 = vld [vmem:[#allocation4 + $0x18] sm:$0xff]
        %v1347 = vld [vmem:[#allocation4 + $0x20] sm:$0xff]
        %v1348 = vld [vmem:[#allocation4 + $0x28] sm:$0xff]
        %1350 = vrot.lane.b32.xlu0 %v1335, 80
        %v1351 = vpop.permute.xlu0 %1350
        %1355 = vrot.lane.b32.xlu0 %v1337, 80
        %v1356 = vpop.permute.xlu0 %1355
        %1357 = vrot.lane.b32.xlu0 %v1338, 80
        %v1358 = vpop.permute.xlu0 %1357
        %1359 = vrot.lane.b32.xlu0 %v1339, 80
        %v1360 = vpop.permute.xlu0 %1359
        %v1361 = vsel %vm727, %v1351, 0
        %v1363 = vsel %vm727, %v1356, 0
        %v1365 = vsel %vm727, %v1358, 0
        %v1367 = vsel %vm727, %v1360, 0
        %1369 = vmatpush.xpose.msra.mxu0 0.0
        %1370 = vmatpush.xpose.msra.mxu0 0.0
        %1371 = vmatpush.xpose.msra.mxu0 0.0
        %1372 = vmatpush.xpose.msra.mxu0 0.0
        %1373 = vmatpush.xpose.msra.mxu0 0.0
        %1374 = vmatpush.xpose.msra.mxu0 0.0
        %1375 = vmatpush.xpose.msra.mxu0 0.0
        %1376 = vmatpush.xpose.msra.mxu0 0.0
        %1377 = vmatpush.xpose.msra.mxu0 0.0
        %1378 = vmatpush.xpose.msra.mxu0 0.0
        %1379 = vmatpush.xpose.msra.mxu0 0.0
        %1380 = vmatpush.xpose.msra.mxu0 0.0
        %1381 = vmatpush.xpose.msra.mxu0 0.0
        %1382 = vmatpush.xpose.msra.mxu0 %v1367
        %1383 = vmatpush.xpose.msra.mxu0 %v1365
        %1384 = vmatpush.xpose.msra.mxu0 %v1363
        %1385 = vmatmul.f32.gmra.mxu0 %v1361
        %v1386 = vpop.f32.mrf.mxu0
        %v1387 = vadd.f32 0.0, %v1386
        %1388 = vdwg.mxu0
        %1390 = vrot.lane.b32.xlu0 %v1336, 80
        %v1391 = vpop.permute.xlu0 %1390
        %1395 = vrot.lane.b32.xlu0 %v1340, 80
        %v1396 = vpop.permute.xlu0 %1395
        %1397 = vrot.lane.b32.xlu0 %v1341, 80
        %v1398 = vpop.permute.xlu0 %1397
        %1399 = vrot.lane.b32.xlu0 %v1342, 80
        %v1400 = vpop.permute.xlu0 %1399
        %v1401 = vsel %vm727, %v1391, 0
        %v1403 = vsel %vm727, %v1396, 0
        %v1405 = vsel %vm727, %v1398, 0
        %v1407 = vsel %vm727, %v1400, 0
        %1409 = vmatpush.xpose.msra.mxu0 0.0
        %1410 = vmatpush.xpose.msra.mxu0 0.0
        %1411 = vmatpush.xpose.msra.mxu0 0.0
        %1412 = vmatpush.xpose.msra.mxu0 0.0
        %1413 = vmatpush.xpose.msra.mxu0 0.0
        %1414 = vmatpush.xpose.msra.mxu0 0.0
        %1415 = vmatpush.xpose.msra.mxu0 0.0
        %1416 = vmatpush.xpose.msra.mxu0 0.0
        %1417 = vmatpush.xpose.msra.mxu0 0.0
        %1418 = vmatpush.xpose.msra.mxu0 0.0
        %1419 = vmatpush.xpose.msra.mxu0 0.0
        %1420 = vmatpush.xpose.msra.mxu0 0.0
        %1421 = vmatpush.xpose.msra.mxu0 0.0
        %1422 = vmatpush.xpose.msra.mxu0 %v1407
        %1423 = vmatpush.xpose.msra.mxu0 %v1405
        %1424 = vmatpush.xpose.msra.mxu0 %v1403
        %1425 = vmatmul.f32.gmra.mxu0 %v1401
        %v1426 = vpop.f32.mrf.mxu0
        %v1427 = vadd.f32 0.0, %v1426
        %1428 = vdwg.mxu0
        %v1429 = vsel %vm792, %v1387, -inf
        %1430 = vmax.xlane.f32.xlu0 %v1429
        %v1431 = vpop.xlane.xlu0 %1430
        %v1432 = vsel %vm792, %v1427, -inf
        %1433 = vmax.xlane.f32.xlu0 %v1432
        %v1434 = vpop.xlane.xlu0 %1433
        %v1435 = vsub.f32 %v1387, %v1431
        %v1436 = vsub.f32 %v1427, %v1434
        %v1437 = vmul.f32 %v1435, 1.442695
        %v1438 = vpow.pop %v1437
        %v1439 = vmul.f32 %v1436, 1.442695
        %v1440 = vpow.pop %v1439
        %v1441 = vsel %vm792, %v1438, 0.0
        %1442 = vadd.xlane.f32.xlu0 %v1441
        %v1443 = vpop.xlane.xlu0 %1442
        %v1444 = vsel %vm792, %v1440, 0.0
        %1445 = vadd.xlane.f32.xlu0 %v1444
        %v1446 = vpop.xlane.xlu0 %1445
        %v1447 = vrcp.pop %v1443
        %v1448 = vmul.f32 %v1443, %v1447
        %v1449 = vsub.f32 1.0, %v1448
        %v1450 = vmul.f32 %v1447, %v1449
        %v1451 = vadd.f32 %v1447, %v1450
        %vm1452 = vweird.f32 %v1443
        %vm1453 = vweird.f32 %v1447
        %vm1454 = vmor %vm1452, %vm1453
        %v1455 = vsel %vm1454, %v1447, %v1451
        %v1456 = vand.u32 2147483647, %v1443
        %vm1457 = vcmp.eq.f32.partialorder %v1456, 8.507059e+37
        %v1458 = vand.u32 %v1443, 2147483648
        %v1459 = vor.u32 1.1754944e-38, %v1458
        %v1460 = vsel %vm1457, %v1459, %v1455
        %v1461 = vrcp.pop %v1446
        %v1462 = vmul.f32 %v1446, %v1461
        %v1463 = vsub.f32 1.0, %v1462
        %v1464 = vmul.f32 %v1461, %v1463
        %v1465 = vadd.f32 %v1461, %v1464
        %vm1466 = vweird.f32 %v1446
        %vm1467 = vweird.f32 %v1461
        %vm1468 = vmor %vm1466, %vm1467
        %v1469 = vsel %vm1468, %v1461, %v1465
        %v1470 = vand.u32 2147483647, %v1446
        %vm1471 = vcmp.eq.f32.partialorder %v1470, 8.507059e+37
        %v1472 = vand.u32 %v1446, 2147483648
        %v1473 = vor.u32 1.1754944e-38, %v1472
        %v1474 = vsel %vm1471, %v1473, %v1469
        %v1475 = vmul.f32 %v1438, %v1460
        %v1476 = vmul.f32 %v1440, %v1474
        %1480 = vrot.lane.b32.xlu0 %v1343, 80
        %v1481 = vpop.permute.xlu0 %1480
        %1482 = vrot.lane.b32.xlu0 %v1344, 80
        %v1483 = vpop.permute.xlu0 %1482
        %1484 = vrot.lane.b32.xlu0 %v1345, 80
        %v1485 = vpop.permute.xlu0 %1484
        %v1490 = vsel %vm792, %v1475, 0
        %1492 = vmatpush.msra.mxu0 0.0
        %1493 = vmatpush.msra.mxu0 0.0
        %1494 = vmatpush.msra.mxu0 0.0
        %1495 = vmatpush.msra.mxu0 0.0
        %1496 = vmatpush.msra.mxu0 0.0
        %1497 = vmatpush.msra.mxu0 0.0
        %1498 = vmatpush.msra.mxu0 0.0
        %1499 = vmatpush.msra.mxu0 0.0
        %1500 = vmatpush.msra.mxu0 0.0
        %1501 = vmatpush.msra.mxu0 0.0
        %1502 = vmatpush.msra.mxu0 0.0
        %1503 = vmatpush.msra.mxu0 0.0
        %1504 = vmatpush.msra.mxu0 0.0
        %1505 = vmatpush.msra.mxu0 %v1485
        %1506 = vmatpush.msra.mxu0 %v1483
        %1507 = vmatpush.msra.mxu0 %v1481
        %1508 = vmatmul.f32.gmra.mxu0 %v1490
        %v1509 = vpop.f32.mrf.mxu0
        %v1510 = vadd.f32 0.0, %v1509
        %1511 = vdwg.mxu0
        %1515 = vrot.lane.b32.xlu0 %v1346, 80
        %v1516 = vpop.permute.xlu0 %1515
        %1517 = vrot.lane.b32.xlu0 %v1347, 80
        %v1518 = vpop.permute.xlu0 %1517
        %1519 = vrot.lane.b32.xlu0 %v1348, 80
        %v1520 = vpop.permute.xlu0 %1519
        %v1525 = vsel %vm792, %v1476, 0
        %1527 = vmatpush.msra.mxu0 0.0
        %1528 = vmatpush.msra.mxu0 0.0
        %1529 = vmatpush.msra.mxu0 0.0
        %1530 = vmatpush.msra.mxu0 0.0
        %1531 = vmatpush.msra.mxu0 0.0
        %1532 = vmatpush.msra.mxu0 0.0
        %1533 = vmatpush.msra.mxu0 0.0
        %1534 = vmatpush.msra.mxu0 0.0
        %1535 = vmatpush.msra.mxu0 0.0
        %1536 = vmatpush.msra.mxu0 0.0
        %1537 = vmatpush.msra.mxu0 0.0
        %1538 = vmatpush.msra.mxu0 0.0
        %1539 = vmatpush.msra.mxu0 0.0
        %1540 = vmatpush.msra.mxu0 %v1520
        %1541 = vmatpush.msra.mxu0 %v1518
        %1542 = vmatpush.msra.mxu0 %v1516
        %1543 = vmatmul.f32.gmra.mxu0 %v1525
        %v1544 = vpop.f32.mrf.mxu0
        %v1545 = vadd.f32 0.0, %v1544
        %1546 = vdwg.mxu0
        %1549 = vrot.lane.b32.xlu0 %v1510, 48
        %v1550 = vpop.permute.xlu0 %1549
        %1551 = vrot.lane.b32.xlu0 %v1545, 48
        %v1552 = vpop.permute.xlu0 %1551
        %vm1555 = vcmask 523648
        %1556 = vst.msk [vmem:[#allocation5] sm:$0xff] %vm1555, %v1550
        %1557 = vst.msk [vmem:[#allocation5 + $0x8] sm:$0xff] %vm1555, %v1552
        %v1558 = vld [vmem:[#allocation5] sm:$0xff]
        %v1559 = vld [vmem:[#allocation5 + $0x8] sm:$0xff]
        %v1560 = vld [vmem:[%s6] sm:$0xff]
        %v1561 = vld [vmem:[%s6 + $0x8] sm:$0xff]
        %v1562 = vld [vmem:[%s6 + $0x10] sm:$0xff]
        %v1563 = vld [vmem:[%s6 + $0x18] sm:$0xff]
        %v1564 = vld [vmem:[%s6 + $0x20] sm:$0xff]
        %v1565 = vld [vmem:[%s6 + $0x28] sm:$0xff]
        %v1566 = vld [vmem:[%s6 + $0x30] sm:$0xff]
        %v1567 = vld [vmem:[%s6 + $0x38] sm:$0xff]
        %v1569 = vsel %vm566, %v1558, 0
        %v1572 = vsel %vm566, %v1559, 0
        %1574 = vmatpush.msra.mxu0 0.0
        %1575 = vmatpush.msra.mxu0 0.0
        %1576 = vmatpush.msra.mxu0 0.0
        %1577 = vmatpush.msra.mxu0 0.0
        %1578 = vmatpush.msra.mxu0 0.0
        %1579 = vmatpush.msra.mxu0 0.0
        %1580 = vmatpush.msra.mxu0 0.0
        %1581 = vmatpush.msra.mxu0 0.0
        %1582 = vmatpush.msra.mxu0 %v1567
        %1583 = vmatpush.msra.mxu0 %v1566
        %1584 = vmatpush.msra.mxu0 %v1565
        %1585 = vmatpush.msra.mxu0 %v1564
        %1586 = vmatpush.msra.mxu0 %v1563
        %1587 = vmatpush.msra.mxu0 %v1562
        %1588 = vmatpush.msra.mxu0 %v1561
        %1589 = vmatpush.msra.mxu0 %v1560
        %1590 = vmatmul.f32.gmra.mxu0 %v1569
        %v1591 = vpop.f32.mrf.mxu0
        %v1592 = vadd.f32 0.0, %v1591
        %1593 = vmatmul.f32.gmra.mxu0 %v1572
        %v1594 = vpop.f32.mrf.mxu0
        %v1595 = vadd.f32 0.0, %v1594
        %1596 = vdwg.mxu0
        %1597 = vst.msk [vmem:[%s355] sm:$0xff] %vm377, %v1592
        %1598 = vst.msk [vmem:[%s355 + $0x8] sm:$0xff] %vm377, %v1595
        %s1599 = sand.u32 %s189, 1
        %s1600 = scalar_lea.sflag [#allocation8], %s1599
        %s1601 = sand.u32 %s189, 1
        %s1602 = smul.addr %s1601, 16
        %s1603 = scalar_lea.vmem [#allocation14], %s1602
        // Predicated region
        $region65: #{tpu_custom_call.1} parent=47 // pred_check
          %p1604 = pneg %p199
        $region66: #{tpu_custom_call.1} parent=47 // pred_check_branch
          %1606 = sbr.rel (%p1604) target = $region68
        $region67: #{tpu_custom_call.1} parent=47 // pred_region
          %s1607 = smul.u32 2, %s24
          %1609 = vsyncadd %s1600, 0
          %s1610 = smul.addr %s1607, 8
          %s1611 = scalar_lea.hbm %s7, %s1610
          %s1612 = sshll.u32 %s1603, 4
          %s1613 = int_to_ptr.vmem [resolvable:$true] %s1612
          %s1614 = sshll.u32 %s1611, 4
          %s1615 = int_to_ptr.hbm [resolvable:$true] %s1614
          %1620 = dma.vmem_to_hbm [thread:$0]  %s1613, 256, %s1615, %s1600, 128, 128, 8
        $region68: #{tpu_custom_call.1} parent=47 // pred_fallthru
          _
      $region48: #{tpu_custom_call.1} parent=5 // pred_fallthru
        _
      %p1621 = scmp.le.s32.totalorder 2, %s19
      // Predicated region
      $region69: #{tpu_custom_call.1} parent=5 // pred_check
        %p1622 = pneg %p1621
      $region70: #{tpu_custom_call.1} parent=5 // pred_check_branch
        %1624 = sbr.rel (%p1622) target = $region72
      $region71: #{tpu_custom_call.1} parent=5 // pred_region
        %s1625 = ssub.s32 %s19, 2
        // Predicated region
        $region73: #{tpu_custom_call.1} parent=71 // pred_check
          %p1626 = pneg %p205
        $region74: #{tpu_custom_call.1} parent=71 // pred_check_branch
          %1628 = sbr.rel (%p1626) target = $region76
        $region75: #{tpu_custom_call.1} parent=71 // pred_region
          %s1629 = sand.u32 %s190, 1
          %s1630 = scalar_lea.sflag [#allocation8], %s1629
          %s1631 = sand.u32 %s190, 1
          %s1632 = smul.addr %s1631, 16
          %s1633 = scalar_lea.vmem [#allocation14], %s1632
          %1635 = dma.done %s1630, 256
        $region76: #{tpu_custom_call.1} parent=71 // pred_fallthru
          _
      $region72: #{tpu_custom_call.1} parent=5 // pred_fallthru
        _
    $region6: #{tpu_custom_call.1} parent=1 // loop_footer
      %s23 = sadd.s32 1, %s19
    $region7: #{tpu_custom_call.1} parent=1 // loop_footer_branch
      %18 = sbr.rel target = $region3
    $region8: #{tpu_custom_call.1} parent=1 // loop_exit
      _
    %1636 = vsyncpa [#allocation7], 1
    %s1637 = scalar_lea.sflag [#allocation7], 1
    %1638 = vsyncpa %s1637, 1
    %1639 = vsyncpa [#allocation10], 1
    %1640 = vsyncpa [#allocation13], 1
    %1641 = vsyncpa [#allocation8], 1
    %s1642 = scalar_lea.sflag [#allocation8], 1
    %1643 = vsyncpa %s1642, 1

</llo_original>
